<compile_context>
chip_gen: v5e
topology: v5e:2x2
jax: 0.10.0
libtpu: 0.0.40
codegen_flags: <defaults>
</compile_context>

<pallas_src>
import functools
import inspect

import jax
import jax.numpy as jnp
from jax.experimental import pallas as pl
from jax.experimental.pallas import tpu as pltpu


# -----------------------------------------------------------------------------------
# Kernel bodies
# -----------------------------------------------------------------------------------

def _encode_and_decode(feats_ref, emb_ref, w_enc_ref, b_enc_ref, w_dec_ref, b_dec_ref,
                       *, bb, t_v, t_s):
    """encoding_phase + prepare_inputs_for_decoder + decoding_phase for one batch block."""
    # ---- encoding_phase: (BB*T_v, D_feat) @ (D_feat, d_model); bf16 MXU, f32 acc ----
    enc = jnp.dot(feats_ref[...], w_enc_ref[...],
                  preferred_element_type=jnp.float32) + b_enc_ref[...]
    d_model = enc.shape[-1]

    # ---- prepare_inputs_for_decoder: per-sample mean-pooled encoder context ----
    # Sublane-axis reduction (XLU slot, idle while the MXU is busy) + broadcast, instead
    # of the previous dense f32 pooling matmul (O(BB^2) FLOPs at the slow f32 MXU rate).
    mean = jnp.sum(enc.reshape(bb, t_v, d_model), axis=1) * (1.0 / t_v)       # (BB, d_model)
    ctx = jnp.broadcast_to(mean[:, None, :], (bb, t_s, d_model))
    ctx = ctx.reshape(bb * t_s, d_model)                                      # (BB*T_s, d_model)

    # ---- decoding_phase: hidden = (emb + ctx) @ W_dec (f32 add path, bf16 MXU) ----
    dec_in = (emb_ref[...].astype(jnp.float32) + ctx).astype(jnp.bfloat16)
    hidden = jnp.dot(dec_in, w_dec_ref[...],
                     preferred_element_type=jnp.float32) + b_dec_ref[...]
    return enc, hidden


def _seq2seq_kernel_fused(feats_ref, emb_ref, w_enc_ref, b_enc_ref, w_dec_ref, b_dec_ref,
                          w_cls_ref, b_cls_ref, enc_out_ref, logits_ref, *, bb, t_v, t_s):
    """Grid = (batch_blocks,).  W_cls is fully VMEM-resident (small-vocab case):
    no vocab grid axis, no hidden-state scratch."""
    enc, hidden = _encode_and_decode(feats_ref, emb_ref, w_enc_ref, b_enc_ref,
                                     w_dec_ref, b_dec_ref, bb=bb, t_v=t_v, t_s=t_s)
    enc_out_ref[...] = enc.astype(enc_out_ref.dtype)
    # ---- cls_head: (BB*T_s, d_model) @ (d_model, V), bf16 MXU, f32 acc ----
    logits = jnp.dot(hidden.astype(jnp.bfloat16), w_cls_ref[...],
                     preferred_element_type=jnp.float32) + b_cls_ref[...]
    logits_ref[...] = logits.astype(logits_ref.dtype)


def _seq2seq_kernel_tiled(feats_ref, emb_ref, w_enc_ref, b_enc_ref, w_dec_ref, b_dec_ref,
                          w_cls_ref, b_cls_ref, enc_out_ref, logits_ref, hidden_ref,
                          *, bb, t_v, t_s):
    """Grid = (batch_blocks, vocab_tiles) for vocabularies too large to keep W_cls
    resident.  Encoder/decoder hidden states are computed once per batch block (vocab
    step 0) and cached in VMEM scratch; every vocab step runs one lane-dense cls tile."""
    @pl.when(pl.program_id(1) == 0)
    def _():
        enc, hidden = _encode_and_decode(feats_ref, emb_ref, w_enc_ref, b_enc_ref,
                                         w_dec_ref, b_dec_ref, bb=bb, t_v=t_v, t_s=t_s)
        enc_out_ref[...] = enc.astype(enc_out_ref.dtype)
        hidden_ref[...] = hidden.astype(hidden_ref.dtype)

    logits = jnp.dot(hidden_ref[...], w_cls_ref[...],
                     preferred_element_type=jnp.float32) + b_cls_ref[...]
    logits_ref[...] = logits.astype(logits_ref.dtype)


# -----------------------------------------------------------------------------------
# Spec helpers
# -----------------------------------------------------------------------------------

try:  # Does this JAX expose BlockSpec.pipeline_mode?  (checked up-front, no dead fallback)
    _HAS_PIPELINE_MODE = "pipeline_mode" in inspect.signature(pl.BlockSpec).parameters
except Exception:  # pragma: no cover
    _HAS_PIPELINE_MODE = False


def _const_spec(shape):
    """Constant-across-grid operand (all-zero index map): single-buffer it when supported.
    The block is never re-fetched, so a second pipeline buffer would be pure VMEM waste."""
    idx = lambda *_: (0,) * len(shape)          # works for 1-D and 2-D grids alike
    if _HAS_PIPELINE_MODE:
        return pl.BlockSpec(shape, idx, pipeline_mode=pl.Buffered(1))
    return pl.BlockSpec(shape, idx)


def _device_hints():
    """(vmem_capacity_bytes, has_multiple_tensorcores) with conservative fallbacks
    (64 MiB = v7x per-core VMEM; single TensorCore) if the queries fail."""
    vmem_cap = 64 * 1024 * 1024
    multi_tc = False
    try:
        vmem_cap = int(getattr(pltpu.get_tpu_info(), "vmem_capacity_bytes", vmem_cap))
    except Exception:
        pass
    try:
        kind = jax.devices()[0].device_kind.lower()
        multi_tc = ("v7" in kind) or ("v4" in kind) or ("v5p" in kind)
    except Exception:
        pass
    return vmem_cap, multi_tc


# -----------------------------------------------------------------------------------
# Wrapper
# -----------------------------------------------------------------------------------

def seq2seq_forward(feats, input_ids, params, *, batch_block=None, vocab_tile=None):
    """Pallas-fused forward pass of the Seq2SeqBase framework.

    Returns a dict mimicking feedforward_step's outputs.
    """
    B, T_v, D_feat = feats.shape
    T_s = input_ids.shape[1]
    d_model = params["w_enc"].shape[1]
    V = params["w_cls"].shape[1]

    vmem_cap, multi_tc = _device_hints()
    vmem_budget = max(8 * 1024 * 1024, vmem_cap // 2)   # leave half of VMEM to the compiler

    # Embedding lookup (gather) is glue, done in plain JAX on a bf16 table.
    # TODO(synk): fuse the gather into the kernel (scalar-prefetched input_ids + in-kernel
    # row gather / per-token DMA from the table) to drop the emb_tokens HBM round trip.
    emb_tokens = jnp.take(params["embedding"].astype(jnp.bfloat16), input_ids, axis=0)

    # --- batch-block choice -----------------------------------------------------------
    # Target >=256-row MXU LHS tiles (v6e/v7x MXUs are 256 wide; on v5e the larger tile
    # just runs extra passes and still amortizes the ~0.35us per-grid-step overhead).
    max_t = max(T_v, T_s)
    if batch_block is None:
        rows_target = 256
        bb_cap = max(1, rows_target // max_t)
        batch_block = B
        for cand in range(min(B, bb_cap), 0, -1):
            if B % cand == 0 and (cand * T_v) % 8 == 0 and (cand * T_s) % 8 == 0:
                batch_block = cand
                break
        # On 2-TensorCore parts the "parallel" batch axis is what gets sharded across
        # cores: keep >=2 (even) batch blocks when that keeps MXU tiles at >=128 rows.
        if multi_tc and B // batch_block < 2:
            for cand in range(batch_block - 1, 0, -1):
                if (B % cand == 0 and (B // cand) % 2 == 0
                        and (cand * T_v) % 8 == 0 and (cand * T_s) % 8 == 0
                        and cand * max_t >= 128):
                    batch_block = cand
                    break
    BB = batch_block
    assert B % BB == 0, f"batch {B} must be divisible by batch_block {BB}"
    nb = B // BB

    # --- flat row-major views & bf16 matmul operands -----------------------------------
    feats2d = feats.reshape(B * T_v, D_feat).astype(jnp.bfloat16)
    emb2d = emb_tokens.reshape(B * T_s, d_model)                    # bf16
    w_enc = params["w_enc"].astype(jnp.bfloat16)
    w_dec = params["w_dec"].astype(jnp.bfloat16)
    w_cls = params["w_cls"].astype(jnp.bfloat16)
    b_enc, b_dec, b_cls = params["b_enc"], params["b_dec"], params["b_cls"]

    # --- VMEM accounting ---------------------------------------------------------------
    base_bytes = (
        2 * BB * T_v * D_feat * 2            # feats block (double-buffered, bf16)
        + 2 * BB * T_s * d_model * 2         # emb block
        + (D_feat + d_model) * d_model * 2   # resident enc/dec weights
        + 2 * d_model * 4                    # enc/dec biases
        + 2 * BB * T_v * d_model * 2         # enc_out block (double-buffered, bf16)
        # largest in-kernel temporaries (compiler-backed VMEM): f32 enc, ctx/dec_in
        + BB * T_v * d_model * 4
        + BB * T_s * d_model * (4 + 2)
    )

    def fused_bytes():
        return (base_bytes
                + d_model * V * 2 + V * 4        # resident W_cls / b_cls (single buffer)
                + 2 * BB * T_s * V * 4           # logits block (double-buffered, f32)
                + BB * T_s * V * 4)              # in-kernel f32 logits before the store

    def tiled_bytes(tv):
        return (base_bytes
                + 2 * (d_model * tv * 2 + tv * 4)  # W_cls / b_cls tile (double-buffered)
                + 2 * BB * T_s * tv * 4            # logits tile (double-buffered, f32)
                + BB * T_s * tv * 4                # in-kernel f32 logits tile
                + BB * T_s * d_model * 2)          # hidden scratch (bf16)

    # --- cls-head layout ---------------------------------------------------------------
    fuse_cls = (vocab_tile is None
                and d_model * V * 2 <= 4 * 1024 * 1024
                and fused_bytes() <= vmem_budget)

    if fuse_cls:
        # Small vocab: W_cls fully resident, no vocab grid axis, no hidden scratch.
        TV, nv = V, 1
        grid = (nb,)
        in_specs = [
            pl.BlockSpec((BB * T_v, D_feat), lambda bi: (bi, 0)),   # feats rows
            pl.BlockSpec((BB * T_s, d_model), lambda bi: (bi, 0)),  # token-embedding rows
            _const_spec((D_feat, d_model)),                         # W_enc (resident)
            _const_spec((1, d_model)),                              # b_enc
            _const_spec((d_model, d_model)),                        # W_dec
            _const_spec((1, d_model)),                              # b_dec
            _const_spec((d_model, V)),                              # W_cls (resident)
            _const_spec((1, V)),                                    # b_cls
        ]
        out_specs = [
            pl.BlockSpec((BB * T_v, d_model), lambda bi: (bi, 0)),  # encoder hidden states
            pl.BlockSpec((BB * T_s, V), lambda bi: (bi, 0)),        # logits (full vocab)
        ]
        scratch_shapes = []
        kernel = functools.partial(_seq2seq_kernel_fused, bb=BB, t_v=T_v, t_s=T_s)
        dim_sem = ("parallel",)
        vmem_est = fused_bytes()
        cls_weight_reads = 1
    else:
        if vocab_tile is None:
            # Largest lane-dense divisor of V that fits this generation's VMEM budget.
            divs = [d for d in range(V, 0, -1) if V % d == 0 and (d % 128 == 0 or d == V)]
            vocab_tile = next((d for d in divs if tiled_bytes(d) <= vmem_budget), divs[-1])
        TV = vocab_tile
        assert V % TV == 0, f"vocab {V} must be divisible by vocab_tile {TV}"
        nv = V // TV
        grid = (nb, nv)
        in_specs = [
            pl.BlockSpec((BB * T_v, D_feat), lambda bi, vi: (bi, 0)),
            pl.BlockSpec((BB * T_s, d_model), lambda bi, vi: (bi, 0)),
            _const_spec((D_feat, d_model)),
            _const_spec((1, d_model)),
            _const_spec((d_model, d_model)),
            _const_spec((1, d_model)),
            pl.BlockSpec((d_model, TV), lambda bi, vi: (0, vi)),    # W_cls vocab tile
            pl.BlockSpec((1, TV), lambda bi, vi: (0, vi)),          # b_cls vocab tile
        ]
        out_specs = [
            pl.BlockSpec((BB * T_v, d_model), lambda bi, vi: (bi, 0)),
            pl.BlockSpec((BB * T_s, TV), lambda bi, vi: (bi, vi)),
        ]
        scratch_shapes = [pltpu.VMEM((BB * T_s, d_model), jnp.bfloat16)]
        kernel = functools.partial(_seq2seq_kernel_tiled, bb=BB, t_v=T_v, t_s=T_s)
        # vocab axis carries the hidden-state scratch across it -> "arbitrary"
        dim_sem = ("parallel", "arbitrary")
        vmem_est = tiled_bytes(TV)
        # W_cls is re-streamed once per batch block; maximizing BB above is the mitigation.
        # TODO(synk): group several batch blocks per vocab sweep for very large B to
        # amortize W_cls HBM traffic further.
        cls_weight_reads = nb

    # --- VMEM limit & cost hint ---------------------------------------------------------
    vmem_limit = min(vmem_cap, max(4 * 1024 * 1024, int(vmem_est * 1.5)))

    flops = 2 * B * (T_v * D_feat * d_model        # encoder
                     + T_s * d_model * d_model     # decoder
                     + T_s * d_model * V)          # cls head
    bytes_accessed = (
        B * T_v * D_feat * 2 + B * T_s * d_model * 2
        + (D_feat + d_model) * d_model * 2 + 2 * d_model * 4
        + cls_weight_reads * (d_model * V * 2 + V * 4)
        + B * T_v * d_model * 2            # bf16 encoder-hidden-states writeback
        + B * T_s * V * 4                  # f32 logits writeback
    )
    cost = pl.CostEstimate(flops=flops, transcendentals=0, bytes_accessed=bytes_accessed)

    enc2d, logits2d = pl.pallas_call(
        kernel,
        out_shape=(
            jax.ShapeDtypeStruct((B * T_v, d_model), jnp.bfloat16),
            jax.ShapeDtypeStruct((B * T_s, V), jnp.float32),
        ),
        grid_spec=pltpu.PrefetchScalarGridSpec(
            num_scalar_prefetch=0,
            grid=grid,
            in_specs=in_specs,
            out_specs=out_specs,
            scratch_shapes=scratch_shapes,
        ),
        compiler_params=pltpu.CompilerParams(
            dimension_semantics=dim_sem,
            vmem_limit_bytes=vmem_limit,
        ),
        cost_estimate=cost,
    )(feats2d, emb2d, w_enc, b_enc, w_dec, b_dec, w_cls, b_cls)

    # process_decoding_phase_outputs with opt={} is identity (no visual-memory late fusion).
    return {
        "encoder_hidden_states": enc2d.reshape(B, T_v, d_model),
        "logits": logits2d.reshape(B, T_s, V),
        "schedule_sampling_prob": 0,
    }


# -----------------------------------------------------------------------------------
# Params / reference
# -----------------------------------------------------------------------------------

def _xavier_uniform(key, fan_in, fan_out):
    a = jnp.sqrt(6.0 / (fan_in + fan_out))
    return jax.random.uniform(key, (fan_in, fan_out), jnp.float32, -a, a)


def init_params(key, D_feat, d_model, vocab):
    k_enc, k_dec, k_cls, k_emb = jax.random.split(key, 4)
    return {
        # nn.Linear: Xavier-uniform weight, zero bias (matches _init_weights)
        "w_enc": _xavier_uniform(k_enc, D_feat, d_model),
        "b_enc": jnp.zeros((1, d_model), jnp.float32),
        "w_dec": _xavier_uniform(k_dec, d_model, d_model),
        "b_dec": jnp.zeros((1, d_model), jnp.float32),
        "w_cls": _xavier_uniform(k_cls, d_model, vocab),
        "b_cls": jnp.zeros((1, vocab), jnp.float32),
        # nn.Embedding: Xavier-uniform (no padding_idx in this instantiation)
        "embedding": _xavier_uniform(k_emb, vocab, d_model),
    }


def _reference(feats, input_ids, params):
    """Pure-JAX reference using the same bf16-on-MXU / f32-accumulate recipe."""
    w_enc = params["w_enc"].astype(jnp.bfloat16)
    w_dec = params["w_dec"].astype(jnp.bfloat16)
    w_cls = params["w_cls"].astype(jnp.bfloat16)
    emb = jnp.take(params["embedding"].astype(jnp.bfloat16), input_ids, axis=0)
    enc = jnp.einsum("btd,df->btf", feats.astype(jnp.bfloat16), w_enc,
                     preferred_element_type=jnp.float32) + params["b_enc"]
    ctx = jnp.mean(enc, axis=1, keepdims=True)
    dec_in = (emb.astype(jnp.float32) + ctx).astype(jnp.bfloat16)
    hidden = (jnp.einsum("btd,df->btf", dec_in, w_dec,
                         preferred_element_type=jnp.float32)
              + params["b_dec"]).astype(jnp.bfloat16)
    logits = jnp.einsum("btd,dv->btv", hidden, w_cls,
                        preferred_element_type=jnp.float32) + params["b_cls"]
    return enc, logits


if __name__ == "__main__":
    B, T_v, D_feat = 32, 8, 128     # video feature sequence
    T_s, d_model, V = 8, 128, 1024  # token sequence, hidden, vocab (lane-dense sizes)

    key = jax.random.PRNGKey(0)
    k_params, k_feats, k_ids = jax.random.split(key, 3)

    params = init_params(k_params, D_feat, d_model, V)
    feats = jax.random.normal(k_feats, (B, T_v, D_feat), jnp.float32)
    input_ids = jax.random.randint(k_ids, (B, T_s), 0, V)

    out = seq2seq_forward(feats, input_ids, params)
    jax.block_until_ready(out["logits"])
    jax.block_until_ready(out["encoder_hidden_states"])

    assert out["encoder_hidden_states"].shape == (B, T_v, d_model)
    assert out["logits"].shape == (B, T_s, V)

    ref_enc, ref_logits = _reference(feats, input_ids, params)
    assert jnp.allclose(out["encoder_hidden_states"].astype(jnp.float32), ref_enc,
                        rtol=5e-2, atol=5e-2)
    assert jnp.allclose(out["logits"], ref_logits, rtol=5e-2, atol=5e-2)

    print("KERNEL_OK")
</pallas_src>

<mosaic_0001>
module attributes {stable_mosaic.version = 11 : i64} {
  func.func @_seq2seq_kernel_fused(%arg0: i32, %arg1: memref<256x128xbf16, #tpu.memory_space<vmem>>, %arg2: memref<256x128xbf16, #tpu.memory_space<vmem>>, %arg3: memref<128x128xbf16, #tpu.memory_space<vmem>>, %arg4: memref<1x128xf32, #tpu.memory_space<vmem>>, %arg5: memref<128x128xbf16, #tpu.memory_space<vmem>>, %arg6: memref<1x128xf32, #tpu.memory_space<vmem>>, %arg7: memref<128x1024xbf16, #tpu.memory_space<vmem>>, %arg8: memref<1x1024xf32, #tpu.memory_space<vmem>>, %arg9: memref<256x128xbf16, #tpu.memory_space<vmem>>, %arg10: memref<256x1024xf32, #tpu.memory_space<vmem>>) attributes {dimension_semantics = [#tpu.dimension_semantics<parallel>], iteration_bounds = array<i64: 1>, scalar_prefetch = 0 : i64, scratch_operands = 0 : i64, tpu.core_type = #tpu.core_type<tc>, window_params = [{transform_indices = @transform_0, window_bounds = array<i64: 256, 128>}, {transform_indices = @transform_1, window_bounds = array<i64: 256, 128>}, {pipeline_mode = #tpu.pipeline_mode<synchronous>, transform_indices = @transform_2, window_bounds = array<i64: 128, 128>}, {pipeline_mode = #tpu.pipeline_mode<synchronous>, transform_indices = @transform_3, window_bounds = array<i64: 1, 128>}, {pipeline_mode = #tpu.pipeline_mode<synchronous>, transform_indices = @transform_4, window_bounds = array<i64: 128, 128>}, {pipeline_mode = #tpu.pipeline_mode<synchronous>, transform_indices = @transform_5, window_bounds = array<i64: 1, 128>}, {pipeline_mode = #tpu.pipeline_mode<synchronous>, transform_indices = @transform_6, window_bounds = array<i64: 128, 1024>}, {pipeline_mode = #tpu.pipeline_mode<synchronous>, transform_indices = @transform_7, window_bounds = array<i64: 1, 1024>}, {transform_indices = @transform_8, window_bounds = array<i64: 256, 128>}, {transform_indices = @transform_9, window_bounds = array<i64: 256, 1024>}]} {
    %c0 = arith.constant 0 : index
    %c0_0 = arith.constant 0 : index
    %0 = vector.load %arg1[%c0, %c0_0] : memref<256x128xbf16, #tpu.memory_space<vmem>>, vector<256x128xbf16>
    %c0_1 = arith.constant 0 : index
    %c0_2 = arith.constant 0 : index
    %1 = vector.load %arg3[%c0_1, %c0_2] : memref<128x128xbf16, #tpu.memory_space<vmem>>, vector<128x128xbf16>
    %cst = arith.constant dense<0.000000e+00> : vector<256x128xf32>
    %2 = tpu.matmul %0, %1, %cst {dimension_numbers = #tpu.dot_dimension_numbers<[1], [0], [0], [1], [0, 0, 1, 1], [], []>} : vector<256x128xbf16>, vector<128x128xbf16>, vector<256x128xf32> -> vector<256x128xf32>
    %c0_3 = arith.constant 0 : index
    %c0_4 = arith.constant 0 : index
    %3 = vector.load %arg4[%c0_3, %c0_4] : memref<1x128xf32, #tpu.memory_space<vmem>>, vector<1x128xf32>
    %4 = vector.broadcast %3 : vector<1x128xf32> to vector<256x128xf32>
    %5 = arith.addf %2, %4 : vector<256x128xf32>
    %6 = vector.shape_cast %5 : vector<256x128xf32> to vector<32x8x128xf32>
    %cst_5 = arith.constant dense<0.000000e+00> : vector<32x128xf32>
    %7 = vector.multi_reduction <add>, %6, %cst_5 [1] : vector<32x8x128xf32> to vector<32x128xf32>
    %cst_6 = arith.constant 1.250000e-01 : f32
    %8 = vector.broadcast %cst_6 : f32 to vector<32x128xf32>
    %9 = arith.mulf %7, %8 : vector<32x128xf32>
    %10 = vector.shape_cast %9 : vector<32x128xf32> to vector<32x1x128xf32>
    %11 = vector.shape_cast %10 : vector<32x1x128xf32> to vector<32x1x128xf32>
    %12 = vector.broadcast %11 : vector<32x1x128xf32> to vector<32x8x128xf32>
    %13 = vector.shape_cast %12 : vector<32x8x128xf32> to vector<256x128xf32>
    %c0_7 = arith.constant 0 : index
    %c0_8 = arith.constant 0 : index
    %14 = vector.load %arg2[%c0_7, %c0_8] : memref<256x128xbf16, #tpu.memory_space<vmem>>, vector<256x128xbf16>
    %15 = arith.extf %14 : vector<256x128xbf16> to vector<256x128xf32>
    %16 = arith.addf %15, %13 : vector<256x128xf32>
    %17 = arith.truncf %16 : vector<256x128xf32> to vector<256x128xbf16>
    %c0_9 = arith.constant 0 : index
    %c0_10 = arith.constant 0 : index
    %18 = vector.load %arg5[%c0_9, %c0_10] : memref<128x128xbf16, #tpu.memory_space<vmem>>, vector<128x128xbf16>
    %cst_11 = arith.constant dense<0.000000e+00> : vector<256x128xf32>
    %19 = tpu.matmul %17, %18, %cst_11 {dimension_numbers = #tpu.dot_dimension_numbers<[1], [0], [0], [1], [0, 0, 1, 1], [], []>} : vector<256x128xbf16>, vector<128x128xbf16>, vector<256x128xf32> -> vector<256x128xf32>
    %c0_12 = arith.constant 0 : index
    %c0_13 = arith.constant 0 : index
    %20 = vector.load %arg6[%c0_12, %c0_13] : memref<1x128xf32, #tpu.memory_space<vmem>>, vector<1x128xf32>
    %21 = vector.broadcast %20 : vector<1x128xf32> to vector<256x128xf32>
    %22 = arith.addf %19, %21 : vector<256x128xf32>
    %23 = arith.truncf %5 : vector<256x128xf32> to vector<256x128xbf16>
    %c0_14 = arith.constant 0 : index
    %c0_15 = arith.constant 0 : index
    %24 = vector.load %arg9[%c0_14, %c0_15] : memref<256x128xbf16, #tpu.memory_space<vmem>>, vector<256x128xbf16>
    tpu.vector_store %arg9[%c0_14, %c0_15], %23 {strides = array<i32>} : memref<256x128xbf16, #tpu.memory_space<vmem>>, vector<256x128xbf16>,
    %25 = arith.truncf %22 : vector<256x128xf32> to vector<256x128xbf16>
    %c0_16 = arith.constant 0 : index
    %c0_17 = arith.constant 0 : index
    %26 = vector.load %arg7[%c0_16, %c0_17] : memref<128x1024xbf16, #tpu.memory_space<vmem>>, vector<128x1024xbf16>
    %cst_18 = arith.constant dense<0.000000e+00> : vector<256x1024xf32>
    %27 = tpu.matmul %25, %26, %cst_18 {dimension_numbers = #tpu.dot_dimension_numbers<[1], [0], [0], [1], [0, 0, 1, 1], [], []>} : vector<256x128xbf16>, vector<128x1024xbf16>, vector<256x1024xf32> -> vector<256x1024xf32>
    %c0_19 = arith.constant 0 : index
    %c0_20 = arith.constant 0 : index
    %28 = vector.load %arg8[%c0_19, %c0_20] : memref<1x1024xf32, #tpu.memory_space<vmem>>, vector<1x1024xf32>
    %29 = vector.broadcast %28 : vector<1x1024xf32> to vector<256x1024xf32>
    %30 = arith.addf %27, %29 : vector<256x1024xf32>
    %c0_21 = arith.constant 0 : index
    %c0_22 = arith.constant 0 : index
    %31 = vector.load %arg10[%c0_21, %c0_22] : memref<256x1024xf32, #tpu.memory_space<vmem>>, vector<256x1024xf32>
    tpu.vector_store %arg10[%c0_21, %c0_22], %30 {strides = array<i32>} : memref<256x1024xf32, #tpu.memory_space<vmem>>, vector<256x1024xf32>,
    return
  }
  func.func @transform_0(%arg0: i32) -> (i32, i32) {
    %c0_i32 = arith.constant 0 : i32
    %c0_i32_0 = arith.constant 0 : i32
    return %arg0, %c0_i32 : i32, i32
  }
  func.func @transform_1(%arg0: i32) -> (i32, i32) {
    %c0_i32 = arith.constant 0 : i32
    %c0_i32_0 = arith.constant 0 : i32
    return %arg0, %c0_i32 : i32, i32
  }
  func.func @transform_2(%arg0: i32) -> (i32, i32) {
    %c0_i32 = arith.constant 0 : i32
    %c0_i32_0 = arith.constant 0 : i32
    %c0_i32_1 = arith.constant 0 : i32
    return %c0_i32, %c0_i32_0 : i32, i32
  }
  func.func @transform_3(%arg0: i32) -> (i32, i32) {
    %c0_i32 = arith.constant 0 : i32
    %c0_i32_0 = arith.constant 0 : i32
    %c0_i32_1 = arith.constant 0 : i32
    return %c0_i32, %c0_i32_0 : i32, i32
  }
  func.func @transform_4(%arg0: i32) -> (i32, i32) {
    %c0_i32 = arith.constant 0 : i32
    %c0_i32_0 = arith.constant 0 : i32
    %c0_i32_1 = arith.constant 0 : i32
    return %c0_i32, %c0_i32_0 : i32, i32
  }
  func.func @transform_5(%arg0: i32) -> (i32, i32) {
    %c0_i32 = arith.constant 0 : i32
    %c0_i32_0 = arith.constant 0 : i32
    %c0_i32_1 = arith.constant 0 : i32
    return %c0_i32, %c0_i32_0 : i32, i32
  }
  func.func @transform_6(%arg0: i32) -> (i32, i32) {
    %c0_i32 = arith.constant 0 : i32
    %c0_i32_0 = arith.constant 0 : i32
    %c0_i32_1 = arith.constant 0 : i32
    return %c0_i32, %c0_i32_0 : i32, i32
  }
  func.func @transform_7(%arg0: i32) -> (i32, i32) {
    %c0_i32 = arith.constant 0 : i32
    %c0_i32_0 = arith.constant 0 : i32
    %c0_i32_1 = arith.constant 0 : i32
    return %c0_i32, %c0_i32_0 : i32, i32
  }
  func.func @transform_8(%arg0: i32) -> (i32, i32) {
    %c0_i32 = arith.constant 0 : i32
    %c0_i32_0 = arith.constant 0 : i32
    return %arg0, %c0_i32 : i32, i32
  }
  func.func @transform_9(%arg0: i32) -> (i32, i32) {
    %c0_i32 = arith.constant 0 : i32
    %c0_i32_0 = arith.constant 0 : i32
    return %arg0, %c0_i32 : i32, i32
  }
}

</mosaic_0001>

<llo_original>
// kernel: tpu_custom_call.1
$region0: #{tpu_custom_call.1}
  #allocation0 [shape = 'u32[]', space=smem, size = 0x4, offset = 0x4, fixed_abs, tag = 'smem constant byte address 0x4 - core index']
  #allocation1 [shape = 'u32[72,128]{1,0:T(1,128)}', space=vmem, size = 0x9000, scoped, tag = 'internal scratch']
  %s0 = inlined_call_operand.hbm [shape: bf16[256,128], index: 0, kind: input, shape index: {}]
  %s1 = inlined_call_operand.hbm [shape: bf16[256,128], index: 1, kind: input, shape index: {}]
  %s2 = inlined_call_operand.hbm [shape: bf16[128,128], index: 2, kind: input, shape index: {}]
  %s3 = inlined_call_operand.vmem [shape: f32[1,128], index: 3, kind: input, shape index: {}]
  %s4 = inlined_call_operand.hbm [shape: bf16[128,128], index: 4, kind: input, shape index: {}]
  %s5 = inlined_call_operand.vmem [shape: f32[1,128], index: 5, kind: input, shape index: {}]
  %s6 = inlined_call_operand.hbm [shape: bf16[128,1024], index: 6, kind: input, shape index: {}]
  %s7 = inlined_call_operand.hbm [shape: f32[1,1024], index: 7, kind: input, shape index: {}]
  %s8 = inlined_call_operand.hbm [shape: bf16[256,128], index: 8, kind: output, shape index: {0}]
  %s9 = inlined_call_operand.hbm [shape: f32[256,1024], index: 9, kind: output, shape index: {1}]
  %10 = xla_tuple %s8, %s9
  %s11 = sld [smem:[#allocation0]]
  $region74: #{tpu_custom_call.1} parent=0
    _
  %s13 = ssub.s32 1, %s11
  %s14 = scalar_select 0, %s13, %s11
  $region1: #{tpu_custom_call.1} parent=0
    #allocation2 [shape = 'u8[65536]{0}', space=vmem, size = 0x10000, scoped, tag = 'input window, operand 0, single buffered']
    #allocation3 [shape = 's32[1]{0}', space=sflag, size = 0x4, scoped, tag = 'scoped memory for tpu_custom_call.1']
    #allocation4 [shape = 's32[1]{0}', space=sflag, size = 0x4, scoped, tag = 'scoped memory for tpu_custom_call.1']
    #allocation5 [shape = 'u8[65536]{0}', space=vmem, size = 0x10000, scoped, tag = 'input window, operand 1, single buffered']
    #allocation6 [shape = 's32[1]{0}', space=sflag, size = 0x4, scoped, tag = 'scoped memory for tpu_custom_call.1']
    #allocation7 [shape = 'u8[32768]{0}', space=vmem, size = 0x8000, scoped, tag = 'input window, operand 2, single buffered']
    #allocation8 [shape = 'u8[32768]{0}', space=vmem, size = 0x8000, scoped, tag = 'input window, operand 4, single buffered']
    #allocation9 [shape = 's32[1]{0}', space=sflag, size = 0x4, scoped, tag = 'scoped memory for tpu_custom_call.1']
    #allocation10 [shape = 'u8[262144]{0}', space=vmem, size = 0x40000, scoped, tag = 'input window, operand 6, single buffered']
    #allocation11 [shape = 'u8[4096]{0}', space=vmem, size = 0x1000, scoped, tag = 'input window, operand 7, single buffered']
    #allocation12 [shape = 's32[1]{0}', space=sflag, size = 0x4, scoped, tag = 'scoped memory for tpu_custom_call.1']
    #allocation13 [shape = 'u8[65536]{0}', space=vmem, size = 0x10000, scoped, tag = 'output window, operand 0, single buffered']
    #allocation14 [shape = 'u8[1048576]{0}', space=vmem, size = 0x100000, scoped, tag = 'output window, operand 1, single buffered']
    #allocation15 [shape = 's32[1]{0}', space=sflag, size = 0x4, scoped, tag = 'scoped memory for tpu_custom_call.1']
    %15 = vsyncpa [#allocation3], 0
    %16 = vsyncpa [#allocation6], 0
    %17 = vsyncpa [#allocation9], 0
    %18 = vsyncpa [#allocation12], 0
    %19 = vsyncpa [#allocation4], 0
    %20 = vsyncpa [#allocation15], 0
    // Predicated region
    $region2: #{tpu_custom_call.1} parent=1 // pred_check
      _
    $region3: #{tpu_custom_call.1} parent=1 // pred_check_branch
      %22 = sbr.rel (0) target = $region5
    $region4: #{tpu_custom_call.1} parent=1 // pred_region
      %24 = vsyncadd [#allocation3], 0
      %s25 = sshll.u32 %s0, 4
      %s26 = int_to_ptr.hbm [resolvable:$true] %s25
      %s27 = sshll.u32 [#allocation2], 4
      %s28 = int_to_ptr.vmem [resolvable:$true] %s27
      %33 = dma.hbm_to_vmem [thread:$0]  %s26, 2048, %s28, [#allocation3], 64, 64, 4
    $region5: #{tpu_custom_call.1} parent=1 // pred_fallthru
      _
    // Predicated region
    $region6: #{tpu_custom_call.1} parent=1 // pred_check
      _
    $region7: #{tpu_custom_call.1} parent=1 // pred_check_branch
      %35 = sbr.rel (0) target = $region9
    $region8: #{tpu_custom_call.1} parent=1 // pred_region
      %37 = vsyncadd [#allocation6], 0
      %s38 = sshll.u32 %s1, 4
      %s39 = int_to_ptr.hbm [resolvable:$true] %s38
      %s40 = sshll.u32 [#allocation5], 4
      %s41 = int_to_ptr.vmem [resolvable:$true] %s40
      %46 = dma.hbm_to_vmem [thread:$0]  %s39, 2048, %s41, [#allocation6], 64, 64, 4
    $region9: #{tpu_custom_call.1} parent=1 // pred_fallthru
      _
    // Predicated region
    $region10: #{tpu_custom_call.1} parent=1 // pred_check
      _
    $region11: #{tpu_custom_call.1} parent=1 // pred_check_branch
      %48 = sbr.rel (0) target = $region13
    $region12: #{tpu_custom_call.1} parent=1 // pred_region
      %50 = vsyncadd [#allocation6], 0
      %s51 = sshll.u32 %s2, 4
      %s52 = int_to_ptr.hbm [resolvable:$true] %s51
      %s53 = sshll.u32 [#allocation7], 4
      %s54 = int_to_ptr.vmem [resolvable:$true] %s53
      %59 = dma.hbm_to_vmem [thread:$0]  %s52, 1024, %s54, [#allocation6], 64, 64, 4
    $region13: #{tpu_custom_call.1} parent=1 // pred_fallthru
      _
    // Predicated region
    $region14: #{tpu_custom_call.1} parent=1 // pred_check
      _
    $region15: #{tpu_custom_call.1} parent=1 // pred_check_branch
      %61 = sbr.rel (0) target = $region17
    $region16: #{tpu_custom_call.1} parent=1 // pred_region
      _
    $region17: #{tpu_custom_call.1} parent=1 // pred_fallthru
      _
    // Predicated region
    $region18: #{tpu_custom_call.1} parent=1 // pred_check
      _
    $region19: #{tpu_custom_call.1} parent=1 // pred_check_branch
      %63 = sbr.rel (0) target = $region21
    $region20: #{tpu_custom_call.1} parent=1 // pred_region
      %65 = vsyncadd [#allocation9], 0
      %s66 = sshll.u32 %s4, 4
      %s67 = int_to_ptr.hbm [resolvable:$true] %s66
      %s68 = sshll.u32 [#allocation8], 4
      %s69 = int_to_ptr.vmem [resolvable:$true] %s68
      %74 = dma.hbm_to_vmem [thread:$0]  %s67, 1024, %s69, [#allocation9], 64, 64, 4
    $region21: #{tpu_custom_call.1} parent=1 // pred_fallthru
      _
    // Predicated region
    $region22: #{tpu_custom_call.1} parent=1 // pred_check
      _
    $region23: #{tpu_custom_call.1} parent=1 // pred_check_branch
      %76 = sbr.rel (0) target = $region25
    $region24: #{tpu_custom_call.1} parent=1 // pred_region
      _
    $region25: #{tpu_custom_call.1} parent=1 // pred_fallthru
      _
    // Predicated region
    $region26: #{tpu_custom_call.1} parent=1 // pred_check
      _
    $region27: #{tpu_custom_call.1} parent=1 // pred_check_branch
      %78 = sbr.rel (0) target = $region29
    $region28: #{tpu_custom_call.1} parent=1 // pred_region
      %80 = vsyncadd [#allocation9], 0
      %s81 = sshll.u32 %s6, 4
      %s82 = int_to_ptr.hbm [resolvable:$true] %s81
      %s83 = sshll.u32 [#allocation10], 4
      %s84 = int_to_ptr.vmem [resolvable:$true] %s83
      %89 = dma.hbm_to_vmem [thread:$0]  %s82, 8192, %s84, [#allocation9], 512, 512, 32
    $region29: #{tpu_custom_call.1} parent=1 // pred_fallthru
      _
    // Predicated region
    $region30: #{tpu_custom_call.1} parent=1 // pred_check
      _
    $region31: #{tpu_custom_call.1} parent=1 // pred_check_branch
      %91 = sbr.rel (0) target = $region33
    $region32: #{tpu_custom_call.1} parent=1 // pred_region
      %93 = vsyncadd [#allocation12], 0
      %s95 = sshll.u32 %s7, 4
      %s96 = int_to_ptr.hbm [resolvable:$true] %s95
      %s97 = sshll.u32 [#allocation11], 4
      %s98 = int_to_ptr.vmem [resolvable:$true] %s97
      %100 = dma.hbm_to_vmem [thread:$0]  %s96, 128, %s98, [#allocation12]
    $region33: #{tpu_custom_call.1} parent=1 // pred_fallthru
      _
    // Predicated region
    $region34: #{tpu_custom_call.1} parent=1 // pred_check
      _
    $region35: #{tpu_custom_call.1} parent=1 // pred_check_branch
      %102 = sbr.rel (0) target = $region37
    $region36: #{tpu_custom_call.1} parent=1 // pred_region
      %104 = dma.done [#allocation3], 2048
    $region37: #{tpu_custom_call.1} parent=1 // pred_fallthru
      _
    // Predicated region
    $region38: #{tpu_custom_call.1} parent=1 // pred_check
      _
    $region39: #{tpu_custom_call.1} parent=1 // pred_check_branch
      %106 = sbr.rel (0) target = $region41
    $region40: #{tpu_custom_call.1} parent=1 // pred_region
      %108 = dma.done [#allocation6], 2048
    $region41: #{tpu_custom_call.1} parent=1 // pred_fallthru
      _
    // Predicated region
    $region42: #{tpu_custom_call.1} parent=1 // pred_check
      _
    $region43: #{tpu_custom_call.1} parent=1 // pred_check_branch
      %110 = sbr.rel (0) target = $region45
    $region44: #{tpu_custom_call.1} parent=1 // pred_region
      %112 = dma.done [#allocation6], 1024
    $region45: #{tpu_custom_call.1} parent=1 // pred_fallthru
      _
    // Predicated region
    $region46: #{tpu_custom_call.1} parent=1 // pred_check
      _
    $region47: #{tpu_custom_call.1} parent=1 // pred_check_branch
      %114 = sbr.rel (0) target = $region49
    $region48: #{tpu_custom_call.1} parent=1 // pred_region
      %116 = dma.done [#allocation9], 1024
    $region49: #{tpu_custom_call.1} parent=1 // pred_fallthru
      _
    // Predicated region
    $region50: #{tpu_custom_call.1} parent=1 // pred_check
      _
    $region51: #{tpu_custom_call.1} parent=1 // pred_check_branch
      %118 = sbr.rel (0) target = $region53
    $region52: #{tpu_custom_call.1} parent=1 // pred_region
      %120 = dma.done [#allocation9], 8192
    $region53: #{tpu_custom_call.1} parent=1 // pred_fallthru
      _
    // Predicated region
    $region54: #{tpu_custom_call.1} parent=1 // pred_check
      _
    $region55: #{tpu_custom_call.1} parent=1 // pred_check_branch
      %122 = sbr.rel (0) target = $region57
    $region56: #{tpu_custom_call.1} parent=1 // pred_region
      %124 = dma.done [#allocation12], 128
    $region57: #{tpu_custom_call.1} parent=1 // pred_fallthru
      _
    %v125 = vld [vmem:[#allocation2] sm:$0xf]
    %v126 = vld [vmem:[#allocation2 + $0x4] sm:$0xf]
    %v127 = vld [vmem:[#allocation2 + $0x8] sm:$0xf]
    %v128 = vld [vmem:[#allocation2 + $0xc] sm:$0xf]
    %v129 = vld [vmem:[#allocation2 + $0x10] sm:$0xf]
    %v130 = vld [vmem:[#allocation2 + $0x14] sm:$0xf]
    %v131 = vld [vmem:[#allocation2 + $0x18] sm:$0xf]
    %v132 = vld [vmem:[#allocation2 + $0x1c] sm:$0xf]
    %v133 = vld [vmem:[#allocation2 + $0x20] sm:$0xf]
    %v134 = vld [vmem:[#allocation2 + $0x24] sm:$0xf]
    %v135 = vld [vmem:[#allocation2 + $0x28] sm:$0xf]
    %v136 = vld [vmem:[#allocation2 + $0x2c] sm:$0xf]
    %v137 = vld [vmem:[#allocation2 + $0x30] sm:$0xf]
    %v138 = vld [vmem:[#allocation2 + $0x34] sm:$0xf]
    %v139 = vld [vmem:[#allocation2 + $0x38] sm:$0xf]
    %v140 = vld [vmem:[#allocation2 + $0x3c] sm:$0xf]
    %v141 = vld [vmem:[#allocation2 + $0x40] sm:$0xf]
    %v142 = vld [vmem:[#allocation2 + $0x44] sm:$0xf]
    %v143 = vld [vmem:[#allocation2 + $0x48] sm:$0xf]
    %v144 = vld [vmem:[#allocation2 + $0x4c] sm:$0xf]
    %v145 = vld [vmem:[#allocation2 + $0x50] sm:$0xf]
    %v146 = vld [vmem:[#allocation2 + $0x54] sm:$0xf]
    %v147 = vld [vmem:[#allocation2 + $0x58] sm:$0xf]
    %v148 = vld [vmem:[#allocation2 + $0x5c] sm:$0xf]
    %v149 = vld [vmem:[#allocation2 + $0x60] sm:$0xf]
    %v150 = vld [vmem:[#allocation2 + $0x64] sm:$0xf]
    %v151 = vld [vmem:[#allocation2 + $0x68] sm:$0xf]
    %v152 = vld [vmem:[#allocation2 + $0x6c] sm:$0xf]
    %v153 = vld [vmem:[#allocation2 + $0x70] sm:$0xf]
    %v154 = vld [vmem:[#allocation2 + $0x74] sm:$0xf]
    %v155 = vld [vmem:[#allocation2 + $0x78] sm:$0xf]
    %v156 = vld [vmem:[#allocation2 + $0x7c] sm:$0xf]
    %v157 = vld [vmem:[#allocation7] sm:$0xf]
    %v158 = vld [vmem:[#allocation7 + $0x4] sm:$0xf]
    %v159 = vld [vmem:[#allocation7 + $0x8] sm:$0xf]
    %v160 = vld [vmem:[#allocation7 + $0xc] sm:$0xf]
    %v161 = vld [vmem:[#allocation7 + $0x10] sm:$0xf]
    %v162 = vld [vmem:[#allocation7 + $0x14] sm:$0xf]
    %v163 = vld [vmem:[#allocation7 + $0x18] sm:$0xf]
    %v164 = vld [vmem:[#allocation7 + $0x1c] sm:$0xf]
    %v165 = vld [vmem:[#allocation7 + $0x20] sm:$0xf]
    %v166 = vld [vmem:[#allocation7 + $0x24] sm:$0xf]
    %v167 = vld [vmem:[#allocation7 + $0x28] sm:$0xf]
    %v168 = vld [vmem:[#allocation7 + $0x2c] sm:$0xf]
    %v169 = vld [vmem:[#allocation7 + $0x30] sm:$0xf]
    %v170 = vld [vmem:[#allocation7 + $0x34] sm:$0xf]
    %v171 = vld [vmem:[#allocation7 + $0x38] sm:$0xf]
    %v172 = vld [vmem:[#allocation7 + $0x3c] sm:$0xf]
    %v173 = vld [vmem:[%s3] sm:$0x1]
    %v175 = vperm.slane %v173, 0
    %v209 = vunpack.c.l.b16 %v125
    %v210 = vunpack.c.l.b16 %v126
    %v211 = vunpack.c.l.b16 %v127
    %v212 = vunpack.c.l.b16 %v128
    %v213 = vunpack.c.l.b16 %v129
    %v214 = vunpack.c.l.b16 %v130
    %v215 = vunpack.c.l.b16 %v131
    %v216 = vunpack.c.l.b16 %v132
    %v217 = vunpack.c.l.b16 %v133
    %v218 = vunpack.c.l.b16 %v134
    %v219 = vunpack.c.l.b16 %v135
    %v220 = vunpack.c.l.b16 %v136
    %v221 = vunpack.c.l.b16 %v137
    %v222 = vunpack.c.l.b16 %v138
    %v223 = vunpack.c.l.b16 %v139
    %v224 = vunpack.c.l.b16 %v140
    %v225 = vunpack.c.l.b16 %v141
    %v226 = vunpack.c.l.b16 %v142
    %v227 = vunpack.c.l.b16 %v143
    %v228 = vunpack.c.l.b16 %v144
    %v229 = vunpack.c.l.b16 %v145
    %v230 = vunpack.c.l.b16 %v146
    %v231 = vunpack.c.l.b16 %v147
    %v232 = vunpack.c.l.b16 %v148
    %v233 = vunpack.c.l.b16 %v149
    %v234 = vunpack.c.l.b16 %v150
    %v235 = vunpack.c.l.b16 %v151
    %v236 = vunpack.c.l.b16 %v152
    %v237 = vunpack.c.l.b16 %v153
    %v238 = vunpack.c.l.b16 %v154
    %v239 = vunpack.c.l.b16 %v155
    %v240 = vunpack.c.l.b16 %v156
    %v241 = vpack.c.b16 %v210, %v209
    %v242 = vpack.c.b16 %v212, %v211
    %v243 = vpack.c.b16 %v214, %v213
    %v244 = vpack.c.b16 %v216, %v215
    %v245 = vpack.c.b16 %v218, %v217
    %v246 = vpack.c.b16 %v220, %v219
    %v247 = vpack.c.b16 %v222, %v221
    %v248 = vpack.c.b16 %v224, %v223
    %v249 = vpack.c.b16 %v226, %v225
    %v250 = vpack.c.b16 %v228, %v227
    %v251 = vpack.c.b16 %v230, %v229
    %v252 = vpack.c.b16 %v232, %v231
    %v253 = vpack.c.b16 %v234, %v233
    %v254 = vpack.c.b16 %v236, %v235
    %v255 = vpack.c.b16 %v238, %v237
    %v256 = vpack.c.b16 %v240, %v239
    %v289 = vunpack.c.l.b16 %v157
    %v290 = vunpack.c.l.b16 %v158
    %v291 = vunpack.c.l.b16 %v159
    %v292 = vunpack.c.l.b16 %v160
    %v293 = vunpack.c.l.b16 %v161
    %v294 = vunpack.c.l.b16 %v162
    %v295 = vunpack.c.l.b16 %v163
    %v296 = vunpack.c.l.b16 %v164
    %v297 = vunpack.c.l.b16 %v165
    %v298 = vunpack.c.l.b16 %v166
    %v299 = vunpack.c.l.b16 %v167
    %v300 = vunpack.c.l.b16 %v168
    %v301 = vunpack.c.l.b16 %v169
    %v302 = vunpack.c.l.b16 %v170
    %v303 = vunpack.c.l.b16 %v171
    %v304 = vunpack.c.l.b16 %v172
    %v305 = vpack.c.b16 %v290, %v289
    %v306 = vpack.c.b16 %v292, %v291
    %v307 = vpack.c.b16 %v294, %v293
    %v308 = vpack.c.b16 %v296, %v295
    %v309 = vpack.c.b16 %v298, %v297
    %v310 = vpack.c.b16 %v300, %v299
    %v311 = vpack.c.b16 %v302, %v301
    %v312 = vpack.c.b16 %v304, %v303
    %321 = vmatpush.bf16.msra.mxu0 %v312
    %322 = vmatpush.bf16.msra.mxu0 %v311
    %323 = vmatpush.bf16.msra.mxu0 %v310
    %324 = vmatpush.bf16.msra.mxu0 %v309
    %325 = vmatpush.bf16.msra.mxu0 %v308
    %326 = vmatpush.bf16.msra.mxu0 %v307
    %327 = vmatpush.bf16.msra.mxu0 %v306
    %328 = vmatpush.bf16.msra.mxu0 %v305
    %329 = vmatmul.bf16.gmra.mxu0 %v241
    %v330 = vpop.f32.mrf.mxu0
    %v331 = vadd.f32 %v175, %v330
    %v332 = vpop.f32.mrf.mxu0
    %v333 = vadd.f32 %v175, %v332
    %334 = vmatmul.bf16.gmra.mxu0 %v242
    %v335 = vpop.f32.mrf.mxu0
    %v336 = vadd.f32 %v175, %v335
    %v337 = vpop.f32.mrf.mxu0
    %v338 = vadd.f32 %v175, %v337
    %339 = vmatmul.bf16.gmra.mxu0 %v243
    %v340 = vpop.f32.mrf.mxu0
    %v341 = vadd.f32 %v175, %v340
    %v342 = vpop.f32.mrf.mxu0
    %v343 = vadd.f32 %v175, %v342
    %344 = vmatmul.bf16.gmra.mxu0 %v244
    %v345 = vpop.f32.mrf.mxu0
    %v346 = vadd.f32 %v175, %v345
    %v347 = vpop.f32.mrf.mxu0
    %v348 = vadd.f32 %v175, %v347
    %349 = vmatmul.bf16.gmra.mxu0 %v245
    %v350 = vpop.f32.mrf.mxu0
    %v351 = vadd.f32 %v175, %v350
    %v352 = vpop.f32.mrf.mxu0
    %v353 = vadd.f32 %v175, %v352
    %354 = vmatmul.bf16.gmra.mxu0 %v246
    %v355 = vpop.f32.mrf.mxu0
    %v356 = vadd.f32 %v175, %v355
    %v357 = vpop.f32.mrf.mxu0
    %v358 = vadd.f32 %v175, %v357
    %359 = vmatmul.bf16.gmra.mxu0 %v247
    %v360 = vpop.f32.mrf.mxu0
    %v361 = vadd.f32 %v175, %v360
    %v362 = vpop.f32.mrf.mxu0
    %v363 = vadd.f32 %v175, %v362
    %364 = vmatmul.bf16.gmra.mxu0 %v248
    %v365 = vpop.f32.mrf.mxu0
    %v366 = vadd.f32 %v175, %v365
    %v367 = vpop.f32.mrf.mxu0
    %v368 = vadd.f32 %v175, %v367
    %369 = vmatmul.bf16.gmra.mxu0 %v249
    %v370 = vpop.f32.mrf.mxu0
    %v371 = vadd.f32 %v175, %v370
    %v372 = vpop.f32.mrf.mxu0
    %v373 = vadd.f32 %v175, %v372
    %374 = vmatmul.bf16.gmra.mxu0 %v250
    %v375 = vpop.f32.mrf.mxu0
    %v376 = vadd.f32 %v175, %v375
    %v377 = vpop.f32.mrf.mxu0
    %v378 = vadd.f32 %v175, %v377
    %379 = vmatmul.bf16.gmra.mxu0 %v251
    %v380 = vpop.f32.mrf.mxu0
    %v381 = vadd.f32 %v175, %v380
    %v382 = vpop.f32.mrf.mxu0
    %v383 = vadd.f32 %v175, %v382
    %384 = vmatmul.bf16.gmra.mxu0 %v252
    %v385 = vpop.f32.mrf.mxu0
    %v386 = vadd.f32 %v175, %v385
    %v387 = vpop.f32.mrf.mxu0
    %v388 = vadd.f32 %v175, %v387
    %389 = vmatmul.bf16.gmra.mxu0 %v253
    %v390 = vpop.f32.mrf.mxu0
    %v391 = vadd.f32 %v175, %v390
    %v392 = vpop.f32.mrf.mxu0
    %v393 = vadd.f32 %v175, %v392
    %394 = vmatmul.bf16.gmra.mxu0 %v254
    %v395 = vpop.f32.mrf.mxu0
    %v396 = vadd.f32 %v175, %v395
    %v397 = vpop.f32.mrf.mxu0
    %v398 = vadd.f32 %v175, %v397
    %399 = vmatmul.bf16.gmra.mxu0 %v255
    %v400 = vpop.f32.mrf.mxu0
    %v401 = vadd.f32 %v175, %v400
    %v402 = vpop.f32.mrf.mxu0
    %v403 = vadd.f32 %v175, %v402
    %404 = vmatmul.bf16.gmra.mxu0 %v256
    %v405 = vpop.f32.mrf.mxu0
    %v406 = vadd.f32 %v175, %v405
    %v407 = vpop.f32.mrf.mxu0
    %v408 = vadd.f32 %v175, %v407
    %409 = vdwg.mxu0
    %v410 = vrot.slane %v331, 4
    %v411 = vadd.f32 %v331, %v410
    %v412 = vrot.slane %v411, 2
    %v413 = vadd.f32 %v411, %v412
    %v414 = vrot.slane %v413, 1
    %v415 = vadd.f32 %v413, %v414
    %v416 = vrot.slane %v333, 4
    %v417 = vadd.f32 %v333, %v416
    %v418 = vrot.slane %v417, 2
    %v419 = vadd.f32 %v417, %v418
    %v420 = vrot.slane %v419, 1
    %v421 = vadd.f32 %v419, %v420
    %v422 = vrot.slane %v336, 4
    %v423 = vadd.f32 %v336, %v422
    %v424 = vrot.slane %v423, 2
    %v425 = vadd.f32 %v423, %v424
    %v426 = vrot.slane %v425, 1
    %v427 = vadd.f32 %v425, %v426
    %v428 = vrot.slane %v338, 4
    %v429 = vadd.f32 %v338, %v428
    %v430 = vrot.slane %v429, 2
    %v431 = vadd.f32 %v429, %v430
    %v432 = vrot.slane %v431, 1
    %v433 = vadd.f32 %v431, %v432
    %v434 = vrot.slane %v341, 4
    %v435 = vadd.f32 %v341, %v434
    %v436 = vrot.slane %v435, 2
    %v437 = vadd.f32 %v435, %v436
    %v438 = vrot.slane %v437, 1
    %v439 = vadd.f32 %v437, %v438
    %v440 = vrot.slane %v343, 4
    %v441 = vadd.f32 %v343, %v440
    %v442 = vrot.slane %v441, 2
    %v443 = vadd.f32 %v441, %v442
    %v444 = vrot.slane %v443, 1
    %v445 = vadd.f32 %v443, %v444
    %v446 = vrot.slane %v346, 4
    %v447 = vadd.f32 %v346, %v446
    %v448 = vrot.slane %v447, 2
    %v449 = vadd.f32 %v447, %v448
    %v450 = vrot.slane %v449, 1
    %v451 = vadd.f32 %v449, %v450
    %v452 = vrot.slane %v348, 4
    %v453 = vadd.f32 %v348, %v452
    %v454 = vrot.slane %v453, 2
    %v455 = vadd.f32 %v453, %v454
    %v456 = vrot.slane %v455, 1
    %v457 = vadd.f32 %v455, %v456
    %v458 = vrot.slane %v351, 4
    %v459 = vadd.f32 %v351, %v458
    %v460 = vrot.slane %v459, 2
    %v461 = vadd.f32 %v459, %v460
    %v462 = vrot.slane %v461, 1
    %v463 = vadd.f32 %v461, %v462
    %v464 = vrot.slane %v353, 4
    %v465 = vadd.f32 %v353, %v464
    %v466 = vrot.slane %v465, 2
    %v467 = vadd.f32 %v465, %v466
    %v468 = vrot.slane %v467, 1
    %v469 = vadd.f32 %v467, %v468
    %v470 = vrot.slane %v356, 4
    %v471 = vadd.f32 %v356, %v470
    %v472 = vrot.slane %v471, 2
    %v473 = vadd.f32 %v471, %v472
    %v474 = vrot.slane %v473, 1
    %v475 = vadd.f32 %v473, %v474
    %v476 = vrot.slane %v358, 4
    %v477 = vadd.f32 %v358, %v476
    %v478 = vrot.slane %v477, 2
    %v479 = vadd.f32 %v477, %v478
    %v480 = vrot.slane %v479, 1
    %v481 = vadd.f32 %v479, %v480
    %v482 = vrot.slane %v361, 4
    %v483 = vadd.f32 %v361, %v482
    %v484 = vrot.slane %v483, 2
    %v485 = vadd.f32 %v483, %v484
    %v486 = vrot.slane %v485, 1
    %v487 = vadd.f32 %v485, %v486
    %v488 = vrot.slane %v363, 4
    %v489 = vadd.f32 %v363, %v488
    %v490 = vrot.slane %v489, 2
    %v491 = vadd.f32 %v489, %v490
    %v492 = vrot.slane %v491, 1
    %v493 = vadd.f32 %v491, %v492
    %v494 = vrot.slane %v366, 4
    %v495 = vadd.f32 %v366, %v494
    %v496 = vrot.slane %v495, 2
    %v497 = vadd.f32 %v495, %v496
    %v498 = vrot.slane %v497, 1
    %v499 = vadd.f32 %v497, %v498
    %v500 = vrot.slane %v368, 4
    %v501 = vadd.f32 %v368, %v500
    %v502 = vrot.slane %v501, 2
    %v503 = vadd.f32 %v501, %v502
    %v504 = vrot.slane %v503, 1
    %v505 = vadd.f32 %v503, %v504
    %v506 = vrot.slane %v371, 4
    %v507 = vadd.f32 %v371, %v506
    %v508 = vrot.slane %v507, 2
    %v509 = vadd.f32 %v507, %v508
    %v510 = vrot.slane %v509, 1
    %v511 = vadd.f32 %v509, %v510
    %v512 = vrot.slane %v373, 4
    %v513 = vadd.f32 %v373, %v512
    %v514 = vrot.slane %v513, 2
    %v515 = vadd.f32 %v513, %v514
    %v516 = vrot.slane %v515, 1
    %v517 = vadd.f32 %v515, %v516
    %v518 = vrot.slane %v376, 4
    %v519 = vadd.f32 %v376, %v518
    %v520 = vrot.slane %v519, 2
    %v521 = vadd.f32 %v519, %v520
    %v522 = vrot.slane %v521, 1
    %v523 = vadd.f32 %v521, %v522
    %v524 = vrot.slane %v378, 4
    %v525 = vadd.f32 %v378, %v524
    %v526 = vrot.slane %v525, 2
    %v527 = vadd.f32 %v525, %v526
    %v528 = vrot.slane %v527, 1
    %v529 = vadd.f32 %v527, %v528
    %v530 = vrot.slane %v381, 4
    %v531 = vadd.f32 %v381, %v530
    %v532 = vrot.slane %v531, 2
    %v533 = vadd.f32 %v531, %v532
    %v534 = vrot.slane %v533, 1
    %v535 = vadd.f32 %v533, %v534
    %v536 = vrot.slane %v383, 4
    %v537 = vadd.f32 %v383, %v536
    %v538 = vrot.slane %v537, 2
    %v539 = vadd.f32 %v537, %v538
    %v540 = vrot.slane %v539, 1
    %v541 = vadd.f32 %v539, %v540
    %v542 = vrot.slane %v386, 4
    %v543 = vadd.f32 %v386, %v542
    %v544 = vrot.slane %v543, 2
    %v545 = vadd.f32 %v543, %v544
    %v546 = vrot.slane %v545, 1
    %v547 = vadd.f32 %v545, %v546
    %v548 = vrot.slane %v388, 4
    %v549 = vadd.f32 %v388, %v548
    %v550 = vrot.slane %v549, 2
    %v551 = vadd.f32 %v549, %v550
    %v552 = vrot.slane %v551, 1
    %v553 = vadd.f32 %v551, %v552
    %v554 = vrot.slane %v391, 4
    %v555 = vadd.f32 %v391, %v554
    %v556 = vrot.slane %v555, 2
    %v557 = vadd.f32 %v555, %v556
    %v558 = vrot.slane %v557, 1
    %v559 = vadd.f32 %v557, %v558
    %v560 = vrot.slane %v393, 4
    %v561 = vadd.f32 %v393, %v560
    %v562 = vrot.slane %v561, 2
    %v563 = vadd.f32 %v561, %v562
    %v564 = vrot.slane %v563, 1
    %v565 = vadd.f32 %v563, %v564
    %v566 = vrot.slane %v396, 4
    %v567 = vadd.f32 %v396, %v566
    %v568 = vrot.slane %v567, 2
    %v569 = vadd.f32 %v567, %v568
    %v570 = vrot.slane %v569, 1
    %v571 = vadd.f32 %v569, %v570
    %v572 = vrot.slane %v398, 4
    %v573 = vadd.f32 %v398, %v572
    %v574 = vrot.slane %v573, 2
    %v575 = vadd.f32 %v573, %v574
    %v576 = vrot.slane %v575, 1
    %v577 = vadd.f32 %v575, %v576
    %v578 = vrot.slane %v401, 4
    %v579 = vadd.f32 %v401, %v578
    %v580 = vrot.slane %v579, 2
    %v581 = vadd.f32 %v579, %v580
    %v582 = vrot.slane %v581, 1
    %v583 = vadd.f32 %v581, %v582
    %v584 = vrot.slane %v403, 4
    %v585 = vadd.f32 %v403, %v584
    %v586 = vrot.slane %v585, 2
    %v587 = vadd.f32 %v585, %v586
    %v588 = vrot.slane %v587, 1
    %v589 = vadd.f32 %v587, %v588
    %v590 = vrot.slane %v406, 4
    %v591 = vadd.f32 %v406, %v590
    %v592 = vrot.slane %v591, 2
    %v593 = vadd.f32 %v591, %v592
    %v594 = vrot.slane %v593, 1
    %v595 = vadd.f32 %v593, %v594
    %v596 = vrot.slane %v408, 4
    %v597 = vadd.f32 %v408, %v596
    %v598 = vrot.slane %v597, 2
    %v599 = vadd.f32 %v597, %v598
    %v600 = vrot.slane %v599, 1
    %v601 = vadd.f32 %v599, %v600
    %v602 = vmul.f32 %v415, 0.125
    %v603 = vmul.f32 %v421, 0.125
    %v604 = vmul.f32 %v427, 0.125
    %v605 = vmul.f32 %v433, 0.125
    %v606 = vmul.f32 %v439, 0.125
    %v607 = vmul.f32 %v445, 0.125
    %v608 = vmul.f32 %v451, 0.125
    %v609 = vmul.f32 %v457, 0.125
    %v610 = vmul.f32 %v463, 0.125
    %v611 = vmul.f32 %v469, 0.125
    %v612 = vmul.f32 %v475, 0.125
    %v613 = vmul.f32 %v481, 0.125
    %v614 = vmul.f32 %v487, 0.125
    %v615 = vmul.f32 %v493, 0.125
    %v616 = vmul.f32 %v499, 0.125
    %v617 = vmul.f32 %v505, 0.125
    %v618 = vmul.f32 %v511, 0.125
    %v619 = vmul.f32 %v517, 0.125
    %v620 = vmul.f32 %v523, 0.125
    %v621 = vmul.f32 %v529, 0.125
    %v622 = vmul.f32 %v535, 0.125
    %v623 = vmul.f32 %v541, 0.125
    %v624 = vmul.f32 %v547, 0.125
    %v625 = vmul.f32 %v553, 0.125
    %v626 = vmul.f32 %v559, 0.125
    %v627 = vmul.f32 %v565, 0.125
    %v628 = vmul.f32 %v571, 0.125
    %v629 = vmul.f32 %v577, 0.125
    %v630 = vmul.f32 %v583, 0.125
    %v631 = vmul.f32 %v589, 0.125
    %v632 = vmul.f32 %v595, 0.125
    %v633 = vmul.f32 %v601, 0.125
    %v634 = vld [vmem:[#allocation5] sm:$0xf]
    %v635 = vld [vmem:[#allocation5 + $0x4] sm:$0xf]
    %v636 = vld [vmem:[#allocation5 + $0x8] sm:$0xf]
    %v637 = vld [vmem:[#allocation5 + $0xc] sm:$0xf]
    %v638 = vld [vmem:[#allocation5 + $0x10] sm:$0xf]
    %v639 = vld [vmem:[#allocation5 + $0x14] sm:$0xf]
    %v640 = vld [vmem:[#allocation5 + $0x18] sm:$0xf]
    %v641 = vld [vmem:[#allocation5 + $0x1c] sm:$0xf]
    %v642 = vld [vmem:[#allocation5 + $0x20] sm:$0xf]
    %v643 = vld [vmem:[#allocation5 + $0x24] sm:$0xf]
    %v644 = vld [vmem:[#allocation5 + $0x28] sm:$0xf]
    %v645 = vld [vmem:[#allocation5 + $0x2c] sm:$0xf]
    %v646 = vld [vmem:[#allocation5 + $0x30] sm:$0xf]
    %v647 = vld [vmem:[#allocation5 + $0x34] sm:$0xf]
    %v648 = vld [vmem:[#allocation5 + $0x38] sm:$0xf]
    %v649 = vld [vmem:[#allocation5 + $0x3c] sm:$0xf]
    %v650 = vld [vmem:[#allocation5 + $0x40] sm:$0xf]
    %v651 = vld [vmem:[#allocation5 + $0x44] sm:$0xf]
    %v652 = vld [vmem:[#allocation5 + $0x48] sm:$0xf]
    %v653 = vld [vmem:[#allocation5 + $0x4c] sm:$0xf]
    %v654 = vld [vmem:[#allocation5 + $0x50] sm:$0xf]
    %v655 = vld [vmem:[#allocation5 + $0x54] sm:$0xf]
    %v656 = vld [vmem:[#allocation5 + $0x58] sm:$0xf]
    %v657 = vld [vmem:[#allocation5 + $0x5c] sm:$0xf]
    %v658 = vld [vmem:[#allocation5 + $0x60] sm:$0xf]
    %v659 = vld [vmem:[#allocation5 + $0x64] sm:$0xf]
    %v660 = vld [vmem:[#allocation5 + $0x68] sm:$0xf]
    %v661 = vld [vmem:[#allocation5 + $0x6c] sm:$0xf]
    %v662 = vld [vmem:[#allocation5 + $0x70] sm:$0xf]
    %v663 = vld [vmem:[#allocation5 + $0x74] sm:$0xf]
    %v664 = vld [vmem:[#allocation5 + $0x78] sm:$0xf]
    %v665 = vld [vmem:[#allocation5 + $0x7c] sm:$0xf]
    %v666 = vunpack.c.l.bf16 %v634
    %v667 = vunpack.c.l.bf16 %v635
    %v668 = vunpack.c.l.bf16 %v636
    %v669 = vunpack.c.l.bf16 %v637
    %v670 = vunpack.c.l.bf16 %v638
    %v671 = vunpack.c.l.bf16 %v639
    %v672 = vunpack.c.l.bf16 %v640
    %v673 = vunpack.c.l.bf16 %v641
    %v674 = vunpack.c.l.bf16 %v642
    %v675 = vunpack.c.l.bf16 %v643
    %v676 = vunpack.c.l.bf16 %v644
    %v677 = vunpack.c.l.bf16 %v645
    %v678 = vunpack.c.l.bf16 %v646
    %v679 = vunpack.c.l.bf16 %v647
    %v680 = vunpack.c.l.bf16 %v648
    %v681 = vunpack.c.l.bf16 %v649
    %v682 = vunpack.c.l.bf16 %v650
    %v683 = vunpack.c.l.bf16 %v651
    %v684 = vunpack.c.l.bf16 %v652
    %v685 = vunpack.c.l.bf16 %v653
    %v686 = vunpack.c.l.bf16 %v654
    %v687 = vunpack.c.l.bf16 %v655
    %v688 = vunpack.c.l.bf16 %v656
    %v689 = vunpack.c.l.bf16 %v657
    %v690 = vunpack.c.l.bf16 %v658
    %v691 = vunpack.c.l.bf16 %v659
    %v692 = vunpack.c.l.bf16 %v660
    %v693 = vunpack.c.l.bf16 %v661
    %v694 = vunpack.c.l.bf16 %v662
    %v695 = vunpack.c.l.bf16 %v663
    %v696 = vunpack.c.l.bf16 %v664
    %v697 = vunpack.c.l.bf16 %v665
    %v698 = vadd.f32 %v666, %v602
    %v699 = vadd.f32 %v667, %v603
    %v700 = vadd.f32 %v668, %v604
    %v701 = vadd.f32 %v669, %v605
    %v702 = vadd.f32 %v670, %v606
    %v703 = vadd.f32 %v671, %v607
    %v704 = vadd.f32 %v672, %v608
    %v705 = vadd.f32 %v673, %v609
    %v706 = vadd.f32 %v674, %v610
    %v707 = vadd.f32 %v675, %v611
    %v708 = vadd.f32 %v676, %v612
    %v709 = vadd.f32 %v677, %v613
    %v710 = vadd.f32 %v678, %v614
    %v711 = vadd.f32 %v679, %v615
    %v712 = vadd.f32 %v680, %v616
    %v713 = vadd.f32 %v681, %v617
    %v714 = vadd.f32 %v682, %v618
    %v715 = vadd.f32 %v683, %v619
    %v716 = vadd.f32 %v684, %v620
    %v717 = vadd.f32 %v685, %v621
    %v718 = vadd.f32 %v686, %v622
    %v719 = vadd.f32 %v687, %v623
    %v720 = vadd.f32 %v688, %v624
    %v721 = vadd.f32 %v689, %v625
    %v722 = vadd.f32 %v690, %v626
    %v723 = vadd.f32 %v691, %v627
    %v724 = vadd.f32 %v692, %v628
    %v725 = vadd.f32 %v693, %v629
    %v726 = vadd.f32 %v694, %v630
    %v727 = vadd.f32 %v695, %v631
    %v728 = vadd.f32 %v696, %v632
    %v729 = vadd.f32 %v697, %v633
    %v730 = vpack.c.bf16 %v699, %v698
    %v731 = vpack.c.bf16 %v701, %v700
    %v732 = vpack.c.bf16 %v703, %v702
    %v733 = vpack.c.bf16 %v705, %v704
    %v734 = vpack.c.bf16 %v707, %v706
    %v735 = vpack.c.bf16 %v709, %v708
    %v736 = vpack.c.bf16 %v711, %v710
    %v737 = vpack.c.bf16 %v713, %v712
    %v738 = vpack.c.bf16 %v715, %v714
    %v739 = vpack.c.bf16 %v717, %v716
    %v740 = vpack.c.bf16 %v719, %v718
    %v741 = vpack.c.bf16 %v721, %v720
    %v742 = vpack.c.bf16 %v723, %v722
    %v743 = vpack.c.bf16 %v725, %v724
    %v744 = vpack.c.bf16 %v727, %v726
    %v745 = vpack.c.bf16 %v729, %v728
    %v746 = vld [vmem:[#allocation8] sm:$0xf]
    %v747 = vld [vmem:[#allocation8 + $0x4] sm:$0xf]
    %v748 = vld [vmem:[#allocation8 + $0x8] sm:$0xf]
    %v749 = vld [vmem:[#allocation8 + $0xc] sm:$0xf]
    %v750 = vld [vmem:[#allocation8 + $0x10] sm:$0xf]
    %v751 = vld [vmem:[#allocation8 + $0x14] sm:$0xf]
    %v752 = vld [vmem:[#allocation8 + $0x18] sm:$0xf]
    %v753 = vld [vmem:[#allocation8 + $0x1c] sm:$0xf]
    %v754 = vld [vmem:[#allocation8 + $0x20] sm:$0xf]
    %v755 = vld [vmem:[#allocation8 + $0x24] sm:$0xf]
    %v756 = vld [vmem:[#allocation8 + $0x28] sm:$0xf]
    %v757 = vld [vmem:[#allocation8 + $0x2c] sm:$0xf]
    %v758 = vld [vmem:[#allocation8 + $0x30] sm:$0xf]
    %v759 = vld [vmem:[#allocation8 + $0x34] sm:$0xf]
    %v760 = vld [vmem:[#allocation8 + $0x38] sm:$0xf]
    %v761 = vld [vmem:[#allocation8 + $0x3c] sm:$0xf]
    %v762 = vld [vmem:[%s5] sm:$0x1]
    %v764 = vperm.slane %v762, 0
    %v782 = vunpack.c.l.b16 %v746
    %v783 = vunpack.c.l.b16 %v747
    %v784 = vunpack.c.l.b16 %v748
    %v785 = vunpack.c.l.b16 %v749
    %v786 = vunpack.c.l.b16 %v750
    %v787 = vunpack.c.l.b16 %v751
    %v788 = vunpack.c.l.b16 %v752
    %v789 = vunpack.c.l.b16 %v753
    %v790 = vunpack.c.l.b16 %v754
    %v791 = vunpack.c.l.b16 %v755
    %v792 = vunpack.c.l.b16 %v756
    %v793 = vunpack.c.l.b16 %v757
    %v794 = vunpack.c.l.b16 %v758
    %v795 = vunpack.c.l.b16 %v759
    %v796 = vunpack.c.l.b16 %v760
    %v797 = vunpack.c.l.b16 %v761
    %v798 = vpack.c.b16 %v783, %v782
    %v799 = vpack.c.b16 %v785, %v784
    %v800 = vpack.c.b16 %v787, %v786
    %v801 = vpack.c.b16 %v789, %v788
    %v802 = vpack.c.b16 %v791, %v790
    %v803 = vpack.c.b16 %v793, %v792
    %v804 = vpack.c.b16 %v795, %v794
    %v805 = vpack.c.b16 %v797, %v796
    %814 = vmatpush.bf16.msra.mxu0 %v805
    %815 = vmatpush.bf16.msra.mxu0 %v804
    %816 = vmatpush.bf16.msra.mxu0 %v803
    %817 = vmatpush.bf16.msra.mxu0 %v802
    %818 = vmatpush.bf16.msra.mxu0 %v801
    %819 = vmatpush.bf16.msra.mxu0 %v800
    %820 = vmatpush.bf16.msra.mxu0 %v799
    %821 = vmatpush.bf16.msra.mxu0 %v798
    %822 = vmatmul.bf16.gmra.mxu0 %v730
    %v823 = vpop.f32.mrf.mxu0
    %v824 = vadd.f32 %v764, %v823
    %v825 = vpop.f32.mrf.mxu0
    %v826 = vadd.f32 %v764, %v825
    %827 = vmatmul.bf16.gmra.mxu0 %v731
    %v828 = vpop.f32.mrf.mxu0
    %v829 = vadd.f32 %v764, %v828
    %v830 = vpop.f32.mrf.mxu0
    %v831 = vadd.f32 %v764, %v830
    %832 = vmatmul.bf16.gmra.mxu0 %v732
    %v833 = vpop.f32.mrf.mxu0
    %v834 = vadd.f32 %v764, %v833
    %v835 = vpop.f32.mrf.mxu0
    %v836 = vadd.f32 %v764, %v835
    %837 = vmatmul.bf16.gmra.mxu0 %v733
    %v838 = vpop.f32.mrf.mxu0
    %v839 = vadd.f32 %v764, %v838
    %v840 = vpop.f32.mrf.mxu0
    %v841 = vadd.f32 %v764, %v840
    %842 = vmatmul.bf16.gmra.mxu0 %v734
    %v843 = vpop.f32.mrf.mxu0
    %v844 = vadd.f32 %v764, %v843
    %v845 = vpop.f32.mrf.mxu0
    %v846 = vadd.f32 %v764, %v845
    %847 = vmatmul.bf16.gmra.mxu0 %v735
    %v848 = vpop.f32.mrf.mxu0
    %v849 = vadd.f32 %v764, %v848
    %v850 = vpop.f32.mrf.mxu0
    %v851 = vadd.f32 %v764, %v850
    %852 = vmatmul.bf16.gmra.mxu0 %v736
    %v853 = vpop.f32.mrf.mxu0
    %v854 = vadd.f32 %v764, %v853
    %v855 = vpop.f32.mrf.mxu0
    %v856 = vadd.f32 %v764, %v855
    %857 = vmatmul.bf16.gmra.mxu0 %v737
    %v858 = vpop.f32.mrf.mxu0
    %v859 = vadd.f32 %v764, %v858
    %v860 = vpop.f32.mrf.mxu0
    %v861 = vadd.f32 %v764, %v860
    %862 = vmatmul.bf16.gmra.mxu0 %v738
    %v863 = vpop.f32.mrf.mxu0
    %v864 = vadd.f32 %v764, %v863
    %v865 = vpop.f32.mrf.mxu0
    %v866 = vadd.f32 %v764, %v865
    %867 = vmatmul.bf16.gmra.mxu0 %v739
    %v868 = vpop.f32.mrf.mxu0
    %v869 = vadd.f32 %v764, %v868
    %v870 = vpop.f32.mrf.mxu0
    %v871 = vadd.f32 %v764, %v870
    %872 = vmatmul.bf16.gmra.mxu0 %v740
    %v873 = vpop.f32.mrf.mxu0
    %v874 = vadd.f32 %v764, %v873
    %v875 = vpop.f32.mrf.mxu0
    %v876 = vadd.f32 %v764, %v875
    %877 = vmatmul.bf16.gmra.mxu0 %v741
    %v878 = vpop.f32.mrf.mxu0
    %v879 = vadd.f32 %v764, %v878
    %v880 = vpop.f32.mrf.mxu0
    %v881 = vadd.f32 %v764, %v880
    %882 = vmatmul.bf16.gmra.mxu0 %v742
    %v883 = vpop.f32.mrf.mxu0
    %v884 = vadd.f32 %v764, %v883
    %v885 = vpop.f32.mrf.mxu0
    %v886 = vadd.f32 %v764, %v885
    %887 = vmatmul.bf16.gmra.mxu0 %v743
    %v888 = vpop.f32.mrf.mxu0
    %v889 = vadd.f32 %v764, %v888
    %v890 = vpop.f32.mrf.mxu0
    %v891 = vadd.f32 %v764, %v890
    %892 = vmatmul.bf16.gmra.mxu0 %v744
    %v893 = vpop.f32.mrf.mxu0
    %v894 = vadd.f32 %v764, %v893
    %v895 = vpop.f32.mrf.mxu0
    %v896 = vadd.f32 %v764, %v895
    %897 = vmatmul.bf16.gmra.mxu0 %v745
    %v898 = vpop.f32.mrf.mxu0
    %v899 = vadd.f32 %v764, %v898
    %v900 = vpop.f32.mrf.mxu0
    %v901 = vadd.f32 %v764, %v900
    %902 = vdwg.mxu0
    %v903 = vpack.c.bf16 %v331, %v331
    %v904 = vpack.c.bf16 %v333, %v333
    %v905 = vpack.c.bf16 %v336, %v336
    %v906 = vpack.c.bf16 %v338, %v338
    %v907 = vpack.c.bf16 %v341, %v341
    %v908 = vpack.c.bf16 %v343, %v343
    %v909 = vpack.c.bf16 %v346, %v346
    %v910 = vpack.c.bf16 %v348, %v348
    %v911 = vpack.c.bf16 %v351, %v351
    %v912 = vpack.c.bf16 %v353, %v353
    %v913 = vpack.c.bf16 %v356, %v356
    %v914 = vpack.c.bf16 %v358, %v358
    %v915 = vpack.c.bf16 %v361, %v361
    %v916 = vpack.c.bf16 %v363, %v363
    %v917 = vpack.c.bf16 %v366, %v366
    %v918 = vpack.c.bf16 %v368, %v368
    %v919 = vpack.c.bf16 %v371, %v371
    %v920 = vpack.c.bf16 %v373, %v373
    %v921 = vpack.c.bf16 %v376, %v376
    %v922 = vpack.c.bf16 %v378, %v378
    %v923 = vpack.c.bf16 %v381, %v381
    %v924 = vpack.c.bf16 %v383, %v383
    %v925 = vpack.c.bf16 %v386, %v386
    %v926 = vpack.c.bf16 %v388, %v388
    %v927 = vpack.c.bf16 %v391, %v391
    %v928 = vpack.c.bf16 %v393, %v393
    %v929 = vpack.c.bf16 %v396, %v396
    %v930 = vpack.c.bf16 %v398, %v398
    %v931 = vpack.c.bf16 %v401, %v401
    %v932 = vpack.c.bf16 %v403, %v403
    %v933 = vpack.c.bf16 %v406, %v406
    %v934 = vpack.c.bf16 %v408, %v408
    %935 = vst [vmem:[#allocation13] sm:$0xf] %v903
    %936 = vst [vmem:[#allocation13 + $0x4] sm:$0xf] %v904
    %937 = vst [vmem:[#allocation13 + $0x8] sm:$0xf] %v905
    %938 = vst [vmem:[#allocation13 + $0xc] sm:$0xf] %v906
    %939 = vst [vmem:[#allocation13 + $0x10] sm:$0xf] %v907
    %940 = vst [vmem:[#allocation13 + $0x14] sm:$0xf] %v908
    %941 = vst [vmem:[#allocation13 + $0x18] sm:$0xf] %v909
    %942 = vst [vmem:[#allocation13 + $0x1c] sm:$0xf] %v910
    %943 = vst [vmem:[#allocation13 + $0x20] sm:$0xf] %v911
    %944 = vst [vmem:[#allocation13 + $0x24] sm:$0xf] %v912
    %945 = vst [vmem:[#allocation13 + $0x28] sm:$0xf] %v913
    %946 = vst [vmem:[#allocation13 + $0x2c] sm:$0xf] %v914
    %947 = vst [vmem:[#allocation13 + $0x30] sm:$0xf] %v915
    %948 = vst [vmem:[#allocation13 + $0x34] sm:$0xf] %v916
    %949 = vst [vmem:[#allocation13 + $0x38] sm:$0xf] %v917
    %950 = vst [vmem:[#allocation13 + $0x3c] sm:$0xf] %v918
    %951 = vst [vmem:[#allocation13 + $0x40] sm:$0xf] %v919
    %952 = vst [vmem:[#allocation13 + $0x44] sm:$0xf] %v920
    %953 = vst [vmem:[#allocation13 + $0x48] sm:$0xf] %v921
    %954 = vst [vmem:[#allocation13 + $0x4c] sm:$0xf] %v922
    %955 = vst [vmem:[#allocation13 + $0x50] sm:$0xf] %v923
    %956 = vst [vmem:[#allocation13 + $0x54] sm:$0xf] %v924
    %957 = vst [vmem:[#allocation13 + $0x58] sm:$0xf] %v925
    %958 = vst [vmem:[#allocation13 + $0x5c] sm:$0xf] %v926
    %959 = vst [vmem:[#allocation13 + $0x60] sm:$0xf] %v927
    %960 = vst [vmem:[#allocation13 + $0x64] sm:$0xf] %v928
    %961 = vst [vmem:[#allocation13 + $0x68] sm:$0xf] %v929
    %962 = vst [vmem:[#allocation13 + $0x6c] sm:$0xf] %v930
    %963 = vst [vmem:[#allocation13 + $0x70] sm:$0xf] %v931
    %964 = vst [vmem:[#allocation13 + $0x74] sm:$0xf] %v932
    %965 = vst [vmem:[#allocation13 + $0x78] sm:$0xf] %v933
    %966 = vst [vmem:[#allocation13 + $0x7c] sm:$0xf] %v934
    %v967 = vpack.c.bf16 %v826, %v824
    %v968 = vpack.c.bf16 %v831, %v829
    %v969 = vpack.c.bf16 %v836, %v834
    %v970 = vpack.c.bf16 %v841, %v839
    %v971 = vpack.c.bf16 %v846, %v844
    %v972 = vpack.c.bf16 %v851, %v849
    %v973 = vpack.c.bf16 %v856, %v854
    %v974 = vpack.c.bf16 %v861, %v859
    %v975 = vpack.c.bf16 %v866, %v864
    %v976 = vpack.c.bf16 %v871, %v869
    %v977 = vpack.c.bf16 %v876, %v874
    %v978 = vpack.c.bf16 %v881, %v879
    %v979 = vpack.c.bf16 %v886, %v884
    %v980 = vpack.c.bf16 %v891, %v889
    %v981 = vpack.c.bf16 %v896, %v894
    %v982 = vpack.c.bf16 %v901, %v899
    %v983 = vld [vmem:[#allocation10] sm:$0xff]
    %v984 = vld [vmem:[#allocation10 + $0x8] sm:$0xff]
    %v985 = vld [vmem:[#allocation10 + $0x10] sm:$0xff]
    %v986 = vld [vmem:[#allocation10 + $0x18] sm:$0xff]
    %v987 = vld [vmem:[#allocation10 + $0x20] sm:$0xff]
    %v988 = vld [vmem:[#allocation10 + $0x28] sm:$0xff]
    %v989 = vld [vmem:[#allocation10 + $0x30] sm:$0xff]
    %v990 = vld [vmem:[#allocation10 + $0x38] sm:$0xff]
    %v991 = vld [vmem:[#allocation10 + $0x40] sm:$0xff]
    %v992 = vld [vmem:[#allocation10 + $0x48] sm:$0xff]
    %v993 = vld [vmem:[#allocation10 + $0x50] sm:$0xff]
    %v994 = vld [vmem:[#allocation10 + $0x58] sm:$0xff]
    %v995 = vld [vmem:[#allocation10 + $0x60] sm:$0xff]
    %v996 = vld [vmem:[#allocation10 + $0x68] sm:$0xff]
    %v997 = vld [vmem:[#allocation10 + $0x70] sm:$0xff]
    %v998 = vld [vmem:[#allocation10 + $0x78] sm:$0xff]
    %v999 = vld [vmem:[#allocation10 + $0x80] sm:$0xff]
    %v1000 = vld [vmem:[#allocation10 + $0x88] sm:$0xff]
    %v1001 = vld [vmem:[#allocation10 + $0x90] sm:$0xff]
    %v1002 = vld [vmem:[#allocation10 + $0x98] sm:$0xff]
    %v1003 = vld [vmem:[#allocation10 + $0xa0] sm:$0xff]
    %v1004 = vld [vmem:[#allocation10 + $0xa8] sm:$0xff]
    %v1005 = vld [vmem:[#allocation10 + $0xb0] sm:$0xff]
    %v1006 = vld [vmem:[#allocation10 + $0xb8] sm:$0xff]
    %v1007 = vld [vmem:[#allocation10 + $0xc0] sm:$0xff]
    %v1008 = vld [vmem:[#allocation10 + $0xc8] sm:$0xff]
    %v1009 = vld [vmem:[#allocation10 + $0xd0] sm:$0xff]
    %v1010 = vld [vmem:[#allocation10 + $0xd8] sm:$0xff]
    %v1011 = vld [vmem:[#allocation10 + $0xe0] sm:$0xff]
    %v1012 = vld [vmem:[#allocation10 + $0xe8] sm:$0xff]
    %v1013 = vld [vmem:[#allocation10 + $0xf0] sm:$0xff]
    %v1014 = vld [vmem:[#allocation10 + $0xf8] sm:$0xff]
    %v1015 = vld [vmem:[#allocation10 + $0x100] sm:$0xff]
    %v1016 = vld [vmem:[#allocation10 + $0x108] sm:$0xff]
    %v1017 = vld [vmem:[#allocation10 + $0x110] sm:$0xff]
    %v1018 = vld [vmem:[#allocation10 + $0x118] sm:$0xff]
    %v1019 = vld [vmem:[#allocation10 + $0x120] sm:$0xff]
    %v1020 = vld [vmem:[#allocation10 + $0x128] sm:$0xff]
    %v1021 = vld [vmem:[#allocation10 + $0x130] sm:$0xff]
    %v1022 = vld [vmem:[#allocation10 + $0x138] sm:$0xff]
    %v1023 = vld [vmem:[#allocation10 + $0x140] sm:$0xff]
    %v1024 = vld [vmem:[#allocation10 + $0x148] sm:$0xff]
    %v1025 = vld [vmem:[#allocation10 + $0x150] sm:$0xff]
    %v1026 = vld [vmem:[#allocation10 + $0x158] sm:$0xff]
    %v1027 = vld [vmem:[#allocation10 + $0x160] sm:$0xff]
    %v1028 = vld [vmem:[#allocation10 + $0x168] sm:$0xff]
    %v1029 = vld [vmem:[#allocation10 + $0x170] sm:$0xff]
    %v1030 = vld [vmem:[#allocation10 + $0x178] sm:$0xff]
    %v1031 = vld [vmem:[#allocation10 + $0x180] sm:$0xff]
    %v1032 = vld [vmem:[#allocation10 + $0x188] sm:$0xff]
    %v1033 = vld [vmem:[#allocation10 + $0x190] sm:$0xff]
    %v1034 = vld [vmem:[#allocation10 + $0x198] sm:$0xff]
    %v1035 = vld [vmem:[#allocation10 + $0x1a0] sm:$0xff]
    %v1036 = vld [vmem:[#allocation10 + $0x1a8] sm:$0xff]
    %v1037 = vld [vmem:[#allocation10 + $0x1b0] sm:$0xff]
    %v1038 = vld [vmem:[#allocation10 + $0x1b8] sm:$0xff]
    %v1039 = vld [vmem:[#allocation10 + $0x1c0] sm:$0xff]
    %v1040 = vld [vmem:[#allocation10 + $0x1c8] sm:$0xff]
    %v1041 = vld [vmem:[#allocation10 + $0x1d0] sm:$0xff]
    %v1042 = vld [vmem:[#allocation10 + $0x1d8] sm:$0xff]
    %v1043 = vld [vmem:[#allocation10 + $0x1e0] sm:$0xff]
    %v1044 = vld [vmem:[#allocation10 + $0x1e8] sm:$0xff]
    %v1045 = vld [vmem:[#allocation10 + $0x1f0] sm:$0xff]
    %v1046 = vld [vmem:[#allocation10 + $0x1f8] sm:$0xff]
    %v1047 = vld [vmem:[#allocation11] sm:$0xff]
    %v1049 = vperm.slane %v1047, 0
    %v1050 = vperm.slane %v1047, 1
    %v1051 = vperm.slane %v1047, 2
    %v1052 = vperm.slane %v1047, 3
    %v1053 = vperm.slane %v1047, 4
    %v1054 = vperm.slane %v1047, 5
    %v1055 = vperm.slane %v1047, 6
    %v1056 = vperm.slane %v1047, 7
    %v1129 = vunpack.c.l.b16 %v983
    %v1130 = vunpack.c.h.b16 %v983
    %v1131 = vunpack.c.l.b16 %v984
    %v1132 = vunpack.c.h.b16 %v984
    %v1133 = vunpack.c.l.b16 %v985
    %v1134 = vunpack.c.h.b16 %v985
    %v1135 = vunpack.c.l.b16 %v986
    %v1136 = vunpack.c.h.b16 %v986
    %v1137 = vunpack.c.l.b16 %v987
    %v1138 = vunpack.c.h.b16 %v987
    %v1139 = vunpack.c.l.b16 %v988
    %v1140 = vunpack.c.h.b16 %v988
    %v1141 = vunpack.c.l.b16 %v989
    %v1142 = vunpack.c.h.b16 %v989
    %v1143 = vunpack.c.l.b16 %v990
    %v1144 = vunpack.c.h.b16 %v990
    %v1145 = vunpack.c.l.b16 %v991
    %v1146 = vunpack.c.h.b16 %v991
    %v1147 = vunpack.c.l.b16 %v992
    %v1148 = vunpack.c.h.b16 %v992
    %v1149 = vunpack.c.l.b16 %v993
    %v1150 = vunpack.c.h.b16 %v993
    %v1151 = vunpack.c.l.b16 %v994
    %v1152 = vunpack.c.h.b16 %v994
    %v1153 = vunpack.c.l.b16 %v995
    %v1154 = vunpack.c.h.b16 %v995
    %v1155 = vunpack.c.l.b16 %v996
    %v1156 = vunpack.c.h.b16 %v996
    %v1157 = vunpack.c.l.b16 %v997
    %v1158 = vunpack.c.h.b16 %v997
    %v1159 = vunpack.c.l.b16 %v998
    %v1160 = vunpack.c.h.b16 %v998
    %v1161 = vunpack.c.l.b16 %v999
    %v1162 = vunpack.c.h.b16 %v999
    %v1163 = vunpack.c.l.b16 %v1000
    %v1164 = vunpack.c.h.b16 %v1000
    %v1165 = vunpack.c.l.b16 %v1001
    %v1166 = vunpack.c.h.b16 %v1001
    %v1167 = vunpack.c.l.b16 %v1002
    %v1168 = vunpack.c.h.b16 %v1002
    %v1169 = vunpack.c.l.b16 %v1003
    %v1170 = vunpack.c.h.b16 %v1003
    %v1171 = vunpack.c.l.b16 %v1004
    %v1172 = vunpack.c.h.b16 %v1004
    %v1173 = vunpack.c.l.b16 %v1005
    %v1174 = vunpack.c.h.b16 %v1005
    %v1175 = vunpack.c.l.b16 %v1006
    %v1176 = vunpack.c.h.b16 %v1006
    %v1177 = vunpack.c.l.b16 %v1007
    %v1178 = vunpack.c.h.b16 %v1007
    %v1179 = vunpack.c.l.b16 %v1008
    %v1180 = vunpack.c.h.b16 %v1008
    %v1181 = vunpack.c.l.b16 %v1009
    %v1182 = vunpack.c.h.b16 %v1009
    %v1183 = vunpack.c.l.b16 %v1010
    %v1184 = vunpack.c.h.b16 %v1010
    %v1185 = vunpack.c.l.b16 %v1011
    %v1186 = vunpack.c.h.b16 %v1011
    %v1187 = vunpack.c.l.b16 %v1012
    %v1188 = vunpack.c.h.b16 %v1012
    %v1189 = vunpack.c.l.b16 %v1013
    %v1190 = vunpack.c.h.b16 %v1013
    %v1191 = vunpack.c.l.b16 %v1014
    %v1192 = vunpack.c.h.b16 %v1014
    %v1193 = vunpack.c.l.b16 %v1015
    %v1194 = vunpack.c.h.b16 %v1015
    %v1195 = vunpack.c.l.b16 %v1016
    %v1196 = vunpack.c.h.b16 %v1016
    %v1197 = vunpack.c.l.b16 %v1017
    %v1198 = vunpack.c.h.b16 %v1017
    %v1199 = vunpack.c.l.b16 %v1018
    %v1200 = vunpack.c.h.b16 %v1018
    %v1201 = vunpack.c.l.b16 %v1019
    %v1202 = vunpack.c.h.b16 %v1019
    %v1203 = vunpack.c.l.b16 %v1020
    %v1204 = vunpack.c.h.b16 %v1020
    %v1205 = vunpack.c.l.b16 %v1021
    %v1206 = vunpack.c.h.b16 %v1021
    %v1207 = vunpack.c.l.b16 %v1022
    %v1208 = vunpack.c.h.b16 %v1022
    %v1209 = vunpack.c.l.b16 %v1023
    %v1210 = vunpack.c.h.b16 %v1023
    %v1211 = vunpack.c.l.b16 %v1024
    %v1212 = vunpack.c.h.b16 %v1024
    %v1213 = vunpack.c.l.b16 %v1025
    %v1214 = vunpack.c.h.b16 %v1025
    %v1215 = vunpack.c.l.b16 %v1026
    %v1216 = vunpack.c.h.b16 %v1026
    %v1217 = vunpack.c.l.b16 %v1027
    %v1218 = vunpack.c.h.b16 %v1027
    %v1219 = vunpack.c.l.b16 %v1028
    %v1220 = vunpack.c.h.b16 %v1028
    %v1221 = vunpack.c.l.b16 %v1029
    %v1222 = vunpack.c.h.b16 %v1029
    %v1223 = vunpack.c.l.b16 %v1030
    %v1224 = vunpack.c.h.b16 %v1030
    %v1225 = vunpack.c.l.b16 %v1031
    %v1226 = vunpack.c.h.b16 %v1031
    %v1227 = vunpack.c.l.b16 %v1032
    %v1228 = vunpack.c.h.b16 %v1032
    %v1229 = vunpack.c.l.b16 %v1033
    %v1230 = vunpack.c.h.b16 %v1033
    %v1231 = vunpack.c.l.b16 %v1034
    %v1232 = vunpack.c.h.b16 %v1034
    %v1233 = vunpack.c.l.b16 %v1035
    %v1234 = vunpack.c.h.b16 %v1035
    %v1235 = vunpack.c.l.b16 %v1036
    %v1236 = vunpack.c.h.b16 %v1036
    %v1237 = vunpack.c.l.b16 %v1037
    %v1238 = vunpack.c.h.b16 %v1037
    %v1239 = vunpack.c.l.b16 %v1038
    %v1240 = vunpack.c.h.b16 %v1038
    %v1241 = vunpack.c.l.b16 %v1039
    %v1242 = vunpack.c.h.b16 %v1039
    %v1243 = vunpack.c.l.b16 %v1040
    %v1244 = vunpack.c.h.b16 %v1040
    %v1245 = vunpack.c.l.b16 %v1041
    %v1246 = vunpack.c.h.b16 %v1041
    %v1247 = vunpack.c.l.b16 %v1042
    %v1248 = vunpack.c.h.b16 %v1042
    %v1249 = vunpack.c.l.b16 %v1043
    %v1250 = vunpack.c.h.b16 %v1043
    %v1251 = vunpack.c.l.b16 %v1044
    %v1252 = vunpack.c.h.b16 %v1044
    %v1253 = vunpack.c.l.b16 %v1045
    %v1254 = vunpack.c.h.b16 %v1045
    %v1255 = vunpack.c.l.b16 %v1046
    %v1256 = vunpack.c.h.b16 %v1046
    %v1257 = vpack.c.b16 %v1137, %v1129
    %v1258 = vpack.c.b16 %v1138, %v1130
    %v1259 = vpack.c.b16 %v1139, %v1131
    %v1260 = vpack.c.b16 %v1140, %v1132
    %v1261 = vpack.c.b16 %v1141, %v1133
    %v1262 = vpack.c.b16 %v1142, %v1134
    %v1263 = vpack.c.b16 %v1143, %v1135
    %v1264 = vpack.c.b16 %v1144, %v1136
    %v1265 = vpack.c.b16 %v1153, %v1145
    %v1266 = vpack.c.b16 %v1154, %v1146
    %v1267 = vpack.c.b16 %v1155, %v1147
    %v1268 = vpack.c.b16 %v1156, %v1148
    %v1269 = vpack.c.b16 %v1157, %v1149
    %v1270 = vpack.c.b16 %v1158, %v1150
    %v1271 = vpack.c.b16 %v1159, %v1151
    %v1272 = vpack.c.b16 %v1160, %v1152
    %v1273 = vpack.c.b16 %v1169, %v1161
    %v1274 = vpack.c.b16 %v1170, %v1162
    %v1275 = vpack.c.b16 %v1171, %v1163
    %v1276 = vpack.c.b16 %v1172, %v1164
    %v1277 = vpack.c.b16 %v1173, %v1165
    %v1278 = vpack.c.b16 %v1174, %v1166
    %v1279 = vpack.c.b16 %v1175, %v1167
    %v1280 = vpack.c.b16 %v1176, %v1168
    %v1281 = vpack.c.b16 %v1185, %v1177
    %v1282 = vpack.c.b16 %v1186, %v1178
    %v1283 = vpack.c.b16 %v1187, %v1179
    %v1284 = vpack.c.b16 %v1188, %v1180
    %v1285 = vpack.c.b16 %v1189, %v1181
    %v1286 = vpack.c.b16 %v1190, %v1182
    %v1287 = vpack.c.b16 %v1191, %v1183
    %v1288 = vpack.c.b16 %v1192, %v1184
    %v1289 = vpack.c.b16 %v1201, %v1193
    %v1290 = vpack.c.b16 %v1202, %v1194
    %v1291 = vpack.c.b16 %v1203, %v1195
    %v1292 = vpack.c.b16 %v1204, %v1196
    %v1293 = vpack.c.b16 %v1205, %v1197
    %v1294 = vpack.c.b16 %v1206, %v1198
    %v1295 = vpack.c.b16 %v1207, %v1199
    %v1296 = vpack.c.b16 %v1208, %v1200
    %v1297 = vpack.c.b16 %v1217, %v1209
    %v1298 = vpack.c.b16 %v1218, %v1210
    %v1299 = vpack.c.b16 %v1219, %v1211
    %v1300 = vpack.c.b16 %v1220, %v1212
    %v1301 = vpack.c.b16 %v1221, %v1213
    %v1302 = vpack.c.b16 %v1222, %v1214
    %v1303 = vpack.c.b16 %v1223, %v1215
    %v1304 = vpack.c.b16 %v1224, %v1216
    %v1305 = vpack.c.b16 %v1233, %v1225
    %v1306 = vpack.c.b16 %v1234, %v1226
    %v1307 = vpack.c.b16 %v1235, %v1227
    %v1308 = vpack.c.b16 %v1236, %v1228
    %v1309 = vpack.c.b16 %v1237, %v1229
    %v1310 = vpack.c.b16 %v1238, %v1230
    %v1311 = vpack.c.b16 %v1239, %v1231
    %v1312 = vpack.c.b16 %v1240, %v1232
    %v1313 = vpack.c.b16 %v1249, %v1241
    %v1314 = vpack.c.b16 %v1250, %v1242
    %v1315 = vpack.c.b16 %v1251, %v1243
    %v1316 = vpack.c.b16 %v1252, %v1244
    %v1317 = vpack.c.b16 %v1253, %v1245
    %v1318 = vpack.c.b16 %v1254, %v1246
    %v1319 = vpack.c.b16 %v1255, %v1247
    %v1320 = vpack.c.b16 %v1256, %v1248
    %1385 = vmatpush.bf16.msra.mxu0 %v1313
    %1386 = vmatpush.bf16.msra.mxu0 %v1305
    %1387 = vmatpush.bf16.msra.mxu0 %v1297
    %1388 = vmatpush.bf16.msra.mxu0 %v1289
    %1389 = vmatpush.bf16.msra.mxu0 %v1281
    %1390 = vmatpush.bf16.msra.mxu0 %v1273
    %1391 = vmatpush.bf16.msra.mxu0 %v1265
    %1392 = vmatpush.bf16.msra.mxu0 %v1257
    %1393 = vmatmul.bf16.gmra.mxu0 %v967
    %v1394 = vpop.f32.mrf.mxu0
    %v1395 = vadd.f32 %v1049, %v1394
    %v1396 = vpop.f32.mrf.mxu0
    %v1397 = vadd.f32 %v1049, %v1396
    %1398 = vmatmul.bf16.gmra.mxu0 %v968
    %v1399 = vpop.f32.mrf.mxu0
    %v1400 = vadd.f32 %v1049, %v1399
    %v1401 = vpop.f32.mrf.mxu0
    %v1402 = vadd.f32 %v1049, %v1401
    %1403 = vmatmul.bf16.gmra.mxu0 %v969
    %v1404 = vpop.f32.mrf.mxu0
    %v1405 = vadd.f32 %v1049, %v1404
    %v1406 = vpop.f32.mrf.mxu0
    %v1407 = vadd.f32 %v1049, %v1406
    %1408 = vmatmul.bf16.gmra.mxu0 %v970
    %v1409 = vpop.f32.mrf.mxu0
    %v1410 = vadd.f32 %v1049, %v1409
    %v1411 = vpop.f32.mrf.mxu0
    %v1412 = vadd.f32 %v1049, %v1411
    %1413 = vmatmul.bf16.gmra.mxu0 %v971
    %v1414 = vpop.f32.mrf.mxu0
    %v1415 = vadd.f32 %v1049, %v1414
    %v1416 = vpop.f32.mrf.mxu0
    %v1417 = vadd.f32 %v1049, %v1416
    %1418 = vmatmul.bf16.gmra.mxu0 %v972
    %v1419 = vpop.f32.mrf.mxu0
    %v1420 = vadd.f32 %v1049, %v1419
    %v1421 = vpop.f32.mrf.mxu0
    %v1422 = vadd.f32 %v1049, %v1421
    %1423 = vmatmul.bf16.gmra.mxu0 %v973
    %v1424 = vpop.f32.mrf.mxu0
    %v1425 = vadd.f32 %v1049, %v1424
    %v1426 = vpop.f32.mrf.mxu0
    %v1427 = vadd.f32 %v1049, %v1426
    %1428 = vmatmul.bf16.gmra.mxu0 %v974
    %v1429 = vpop.f32.mrf.mxu0
    %v1430 = vadd.f32 %v1049, %v1429
    %v1431 = vpop.f32.mrf.mxu0
    %v1432 = vadd.f32 %v1049, %v1431
    %1433 = vmatmul.bf16.gmra.mxu0 %v975
    %v1434 = vpop.f32.mrf.mxu0
    %v1435 = vadd.f32 %v1049, %v1434
    %v1436 = vpop.f32.mrf.mxu0
    %v1437 = vadd.f32 %v1049, %v1436
    %1438 = vmatmul.bf16.gmra.mxu0 %v976
    %v1439 = vpop.f32.mrf.mxu0
    %v1440 = vadd.f32 %v1049, %v1439
    %v1441 = vpop.f32.mrf.mxu0
    %v1442 = vadd.f32 %v1049, %v1441
    %1443 = vmatmul.bf16.gmra.mxu0 %v977
    %v1444 = vpop.f32.mrf.mxu0
    %v1445 = vadd.f32 %v1049, %v1444
    %v1446 = vpop.f32.mrf.mxu0
    %v1447 = vadd.f32 %v1049, %v1446
    %1448 = vmatmul.bf16.gmra.mxu0 %v978
    %v1449 = vpop.f32.mrf.mxu0
    %v1450 = vadd.f32 %v1049, %v1449
    %v1451 = vpop.f32.mrf.mxu0
    %v1452 = vadd.f32 %v1049, %v1451
    %1453 = vmatmul.bf16.gmra.mxu0 %v979
    %v1454 = vpop.f32.mrf.mxu0
    %v1455 = vadd.f32 %v1049, %v1454
    %v1456 = vpop.f32.mrf.mxu0
    %v1457 = vadd.f32 %v1049, %v1456
    %1458 = vmatmul.bf16.gmra.mxu0 %v980
    %v1459 = vpop.f32.mrf.mxu0
    %v1460 = vadd.f32 %v1049, %v1459
    %v1461 = vpop.f32.mrf.mxu0
    %v1462 = vadd.f32 %v1049, %v1461
    %1463 = vmatmul.bf16.gmra.mxu0 %v981
    %v1464 = vpop.f32.mrf.mxu0
    %v1465 = vadd.f32 %v1049, %v1464
    %v1466 = vpop.f32.mrf.mxu0
    %v1467 = vadd.f32 %v1049, %v1466
    %1468 = vmatmul.bf16.gmra.mxu0 %v982
    %v1469 = vpop.f32.mrf.mxu0
    %v1470 = vadd.f32 %v1049, %v1469
    %v1471 = vpop.f32.mrf.mxu0
    %v1472 = vadd.f32 %v1049, %v1471
    %1473 = vdwg.mxu0
    %1474 = vmatpush.bf16.msra.mxu0 %v1314
    %1475 = vmatpush.bf16.msra.mxu0 %v1306
    %1476 = vmatpush.bf16.msra.mxu0 %v1298
    %1477 = vmatpush.bf16.msra.mxu0 %v1290
    %1478 = vmatpush.bf16.msra.mxu0 %v1282
    %1479 = vmatpush.bf16.msra.mxu0 %v1274
    %1480 = vmatpush.bf16.msra.mxu0 %v1266
    %1481 = vmatpush.bf16.msra.mxu0 %v1258
    %1482 = vmatmul.bf16.gmra.mxu0 %v967
    %v1483 = vpop.f32.mrf.mxu0
    %v1484 = vadd.f32 %v1050, %v1483
    %v1485 = vpop.f32.mrf.mxu0
    %v1486 = vadd.f32 %v1050, %v1485
    %1487 = vmatmul.bf16.gmra.mxu0 %v968
    %v1488 = vpop.f32.mrf.mxu0
    %v1489 = vadd.f32 %v1050, %v1488
    %v1490 = vpop.f32.mrf.mxu0
    %v1491 = vadd.f32 %v1050, %v1490
    %1492 = vmatmul.bf16.gmra.mxu0 %v969
    %v1493 = vpop.f32.mrf.mxu0
    %v1494 = vadd.f32 %v1050, %v1493
    %v1495 = vpop.f32.mrf.mxu0
    %v1496 = vadd.f32 %v1050, %v1495
    %1497 = vmatmul.bf16.gmra.mxu0 %v970
    %v1498 = vpop.f32.mrf.mxu0
    %v1499 = vadd.f32 %v1050, %v1498
    %v1500 = vpop.f32.mrf.mxu0
    %v1501 = vadd.f32 %v1050, %v1500
    %1502 = vmatmul.bf16.gmra.mxu0 %v971
    %v1503 = vpop.f32.mrf.mxu0
    %v1504 = vadd.f32 %v1050, %v1503
    %v1505 = vpop.f32.mrf.mxu0
    %v1506 = vadd.f32 %v1050, %v1505
    %1507 = vmatmul.bf16.gmra.mxu0 %v972
    %v1508 = vpop.f32.mrf.mxu0
    %v1509 = vadd.f32 %v1050, %v1508
    %v1510 = vpop.f32.mrf.mxu0
    %v1511 = vadd.f32 %v1050, %v1510
    %1512 = vmatmul.bf16.gmra.mxu0 %v973
    %v1513 = vpop.f32.mrf.mxu0
    %v1514 = vadd.f32 %v1050, %v1513
    %v1515 = vpop.f32.mrf.mxu0
    %v1516 = vadd.f32 %v1050, %v1515
    %1517 = vmatmul.bf16.gmra.mxu0 %v974
    %v1518 = vpop.f32.mrf.mxu0
    %v1519 = vadd.f32 %v1050, %v1518
    %v1520 = vpop.f32.mrf.mxu0
    %v1521 = vadd.f32 %v1050, %v1520
    %1522 = vmatmul.bf16.gmra.mxu0 %v975
    %v1523 = vpop.f32.mrf.mxu0
    %v1524 = vadd.f32 %v1050, %v1523
    %v1525 = vpop.f32.mrf.mxu0
    %v1526 = vadd.f32 %v1050, %v1525
    %1527 = vmatmul.bf16.gmra.mxu0 %v976
    %v1528 = vpop.f32.mrf.mxu0
    %v1529 = vadd.f32 %v1050, %v1528
    %v1530 = vpop.f32.mrf.mxu0
    %v1531 = vadd.f32 %v1050, %v1530
    %1532 = vmatmul.bf16.gmra.mxu0 %v977
    %v1533 = vpop.f32.mrf.mxu0
    %v1534 = vadd.f32 %v1050, %v1533
    %v1535 = vpop.f32.mrf.mxu0
    %v1536 = vadd.f32 %v1050, %v1535
    %1537 = vmatmul.bf16.gmra.mxu0 %v978
    %v1538 = vpop.f32.mrf.mxu0
    %v1539 = vadd.f32 %v1050, %v1538
    %v1540 = vpop.f32.mrf.mxu0
    %v1541 = vadd.f32 %v1050, %v1540
    %1542 = vmatmul.bf16.gmra.mxu0 %v979
    %v1543 = vpop.f32.mrf.mxu0
    %v1544 = vadd.f32 %v1050, %v1543
    %v1545 = vpop.f32.mrf.mxu0
    %v1546 = vadd.f32 %v1050, %v1545
    %1547 = vmatmul.bf16.gmra.mxu0 %v980
    %v1548 = vpop.f32.mrf.mxu0
    %v1549 = vadd.f32 %v1050, %v1548
    %v1550 = vpop.f32.mrf.mxu0
    %v1551 = vadd.f32 %v1050, %v1550
    %1552 = vmatmul.bf16.gmra.mxu0 %v981
    %v1553 = vpop.f32.mrf.mxu0
    %v1554 = vadd.f32 %v1050, %v1553
    %v1555 = vpop.f32.mrf.mxu0
    %v1556 = vadd.f32 %v1050, %v1555
    %1557 = vmatmul.bf16.gmra.mxu0 %v982
    %v1558 = vpop.f32.mrf.mxu0
    %v1559 = vadd.f32 %v1050, %v1558
    %v1560 = vpop.f32.mrf.mxu0
    %v1561 = vadd.f32 %v1050, %v1560
    %1562 = vdwg.mxu0
    %1563 = vmatpush.bf16.msra.mxu0 %v1315
    %1564 = vmatpush.bf16.msra.mxu0 %v1307
    %1565 = vmatpush.bf16.msra.mxu0 %v1299
    %1566 = vmatpush.bf16.msra.mxu0 %v1291
    %1567 = vmatpush.bf16.msra.mxu0 %v1283
    %1568 = vmatpush.bf16.msra.mxu0 %v1275
    %1569 = vmatpush.bf16.msra.mxu0 %v1267
    %1570 = vmatpush.bf16.msra.mxu0 %v1259
    %1571 = vmatmul.bf16.gmra.mxu0 %v967
    %v1572 = vpop.f32.mrf.mxu0
    %v1573 = vadd.f32 %v1051, %v1572
    %v1574 = vpop.f32.mrf.mxu0
    %v1575 = vadd.f32 %v1051, %v1574
    %1576 = vmatmul.bf16.gmra.mxu0 %v968
    %v1577 = vpop.f32.mrf.mxu0
    %v1578 = vadd.f32 %v1051, %v1577
    %v1579 = vpop.f32.mrf.mxu0
    %v1580 = vadd.f32 %v1051, %v1579
    %1581 = vmatmul.bf16.gmra.mxu0 %v969
    %v1582 = vpop.f32.mrf.mxu0
    %v1583 = vadd.f32 %v1051, %v1582
    %v1584 = vpop.f32.mrf.mxu0
    %v1585 = vadd.f32 %v1051, %v1584
    %1586 = vmatmul.bf16.gmra.mxu0 %v970
    %v1587 = vpop.f32.mrf.mxu0
    %v1588 = vadd.f32 %v1051, %v1587
    %v1589 = vpop.f32.mrf.mxu0
    %v1590 = vadd.f32 %v1051, %v1589
    %1591 = vmatmul.bf16.gmra.mxu0 %v971
    %v1592 = vpop.f32.mrf.mxu0
    %v1593 = vadd.f32 %v1051, %v1592
    %v1594 = vpop.f32.mrf.mxu0
    %v1595 = vadd.f32 %v1051, %v1594
    %1596 = vmatmul.bf16.gmra.mxu0 %v972
    %v1597 = vpop.f32.mrf.mxu0
    %v1598 = vadd.f32 %v1051, %v1597
    %v1599 = vpop.f32.mrf.mxu0
    %v1600 = vadd.f32 %v1051, %v1599
    %1601 = vmatmul.bf16.gmra.mxu0 %v973
    %v1602 = vpop.f32.mrf.mxu0
    %v1603 = vadd.f32 %v1051, %v1602
    %v1604 = vpop.f32.mrf.mxu0
    %v1605 = vadd.f32 %v1051, %v1604
    %1606 = vmatmul.bf16.gmra.mxu0 %v974
    %v1607 = vpop.f32.mrf.mxu0
    %v1608 = vadd.f32 %v1051, %v1607
    %v1609 = vpop.f32.mrf.mxu0
    %v1610 = vadd.f32 %v1051, %v1609
    %1611 = vmatmul.bf16.gmra.mxu0 %v975
    %v1612 = vpop.f32.mrf.mxu0
    %v1613 = vadd.f32 %v1051, %v1612
    %v1614 = vpop.f32.mrf.mxu0
    %v1615 = vadd.f32 %v1051, %v1614
    %1616 = vmatmul.bf16.gmra.mxu0 %v976
    %v1617 = vpop.f32.mrf.mxu0
    %v1618 = vadd.f32 %v1051, %v1617
    %v1619 = vpop.f32.mrf.mxu0
    %v1620 = vadd.f32 %v1051, %v1619
    %1621 = vmatmul.bf16.gmra.mxu0 %v977
    %v1622 = vpop.f32.mrf.mxu0
    %v1623 = vadd.f32 %v1051, %v1622
    %v1624 = vpop.f32.mrf.mxu0
    %v1625 = vadd.f32 %v1051, %v1624
    %1626 = vmatmul.bf16.gmra.mxu0 %v978
    %v1627 = vpop.f32.mrf.mxu0
    %v1628 = vadd.f32 %v1051, %v1627
    %v1629 = vpop.f32.mrf.mxu0
    %v1630 = vadd.f32 %v1051, %v1629
    %1631 = vmatmul.bf16.gmra.mxu0 %v979
    %v1632 = vpop.f32.mrf.mxu0
    %v1633 = vadd.f32 %v1051, %v1632
    %v1634 = vpop.f32.mrf.mxu0
    %v1635 = vadd.f32 %v1051, %v1634
    %1636 = vmatmul.bf16.gmra.mxu0 %v980
    %v1637 = vpop.f32.mrf.mxu0
    %v1638 = vadd.f32 %v1051, %v1637
    %v1639 = vpop.f32.mrf.mxu0
    %v1640 = vadd.f32 %v1051, %v1639
    %1641 = vmatmul.bf16.gmra.mxu0 %v981
    %v1642 = vpop.f32.mrf.mxu0
    %v1643 = vadd.f32 %v1051, %v1642
    %v1644 = vpop.f32.mrf.mxu0
    %v1645 = vadd.f32 %v1051, %v1644
    %1646 = vmatmul.bf16.gmra.mxu0 %v982
    %v1647 = vpop.f32.mrf.mxu0
    %v1648 = vadd.f32 %v1051, %v1647
    %v1649 = vpop.f32.mrf.mxu0
    %v1650 = vadd.f32 %v1051, %v1649
    %1651 = vdwg.mxu0
    %1652 = vmatpush.bf16.msra.mxu0 %v1316
    %1653 = vmatpush.bf16.msra.mxu0 %v1308
    %1654 = vmatpush.bf16.msra.mxu0 %v1300
    %1655 = vmatpush.bf16.msra.mxu0 %v1292
    %1656 = vmatpush.bf16.msra.mxu0 %v1284
    %1657 = vmatpush.bf16.msra.mxu0 %v1276
    %1658 = vmatpush.bf16.msra.mxu0 %v1268
    %1659 = vmatpush.bf16.msra.mxu0 %v1260
    %1660 = vmatmul.bf16.gmra.mxu0 %v967
    %v1661 = vpop.f32.mrf.mxu0
    %v1662 = vadd.f32 %v1052, %v1661
    %v1663 = vpop.f32.mrf.mxu0
    %v1664 = vadd.f32 %v1052, %v1663
    %1665 = vmatmul.bf16.gmra.mxu0 %v968
    %v1666 = vpop.f32.mrf.mxu0
    %v1667 = vadd.f32 %v1052, %v1666
    %v1668 = vpop.f32.mrf.mxu0
    %v1669 = vadd.f32 %v1052, %v1668
    %1670 = vmatmul.bf16.gmra.mxu0 %v969
    %v1671 = vpop.f32.mrf.mxu0
    %v1672 = vadd.f32 %v1052, %v1671
    %v1673 = vpop.f32.mrf.mxu0
    %v1674 = vadd.f32 %v1052, %v1673
    %1675 = vmatmul.bf16.gmra.mxu0 %v970
    %v1676 = vpop.f32.mrf.mxu0
    %v1677 = vadd.f32 %v1052, %v1676
    %v1678 = vpop.f32.mrf.mxu0
    %v1679 = vadd.f32 %v1052, %v1678
    %1680 = vmatmul.bf16.gmra.mxu0 %v971
    %v1681 = vpop.f32.mrf.mxu0
    %v1682 = vadd.f32 %v1052, %v1681
    %v1683 = vpop.f32.mrf.mxu0
    %v1684 = vadd.f32 %v1052, %v1683
    %1685 = vmatmul.bf16.gmra.mxu0 %v972
    %v1686 = vpop.f32.mrf.mxu0
    %v1687 = vadd.f32 %v1052, %v1686
    %v1688 = vpop.f32.mrf.mxu0
    %v1689 = vadd.f32 %v1052, %v1688
    %1690 = vmatmul.bf16.gmra.mxu0 %v973
    %v1691 = vpop.f32.mrf.mxu0
    %v1692 = vadd.f32 %v1052, %v1691
    %v1693 = vpop.f32.mrf.mxu0
    %v1694 = vadd.f32 %v1052, %v1693
    %1695 = vmatmul.bf16.gmra.mxu0 %v974
    %v1696 = vpop.f32.mrf.mxu0
    %v1697 = vadd.f32 %v1052, %v1696
    %v1698 = vpop.f32.mrf.mxu0
    %v1699 = vadd.f32 %v1052, %v1698
    %1700 = vmatmul.bf16.gmra.mxu0 %v975
    %v1701 = vpop.f32.mrf.mxu0
    %v1702 = vadd.f32 %v1052, %v1701
    %v1703 = vpop.f32.mrf.mxu0
    %v1704 = vadd.f32 %v1052, %v1703
    %1705 = vmatmul.bf16.gmra.mxu0 %v976
    %v1706 = vpop.f32.mrf.mxu0
    %v1707 = vadd.f32 %v1052, %v1706
    %v1708 = vpop.f32.mrf.mxu0
    %v1709 = vadd.f32 %v1052, %v1708
    %1710 = vmatmul.bf16.gmra.mxu0 %v977
    %v1711 = vpop.f32.mrf.mxu0
    %v1712 = vadd.f32 %v1052, %v1711
    %v1713 = vpop.f32.mrf.mxu0
    %v1714 = vadd.f32 %v1052, %v1713
    %1715 = vmatmul.bf16.gmra.mxu0 %v978
    %v1716 = vpop.f32.mrf.mxu0
    %v1717 = vadd.f32 %v1052, %v1716
    %v1718 = vpop.f32.mrf.mxu0
    %v1719 = vadd.f32 %v1052, %v1718
    %1720 = vmatmul.bf16.gmra.mxu0 %v979
    %v1721 = vpop.f32.mrf.mxu0
    %v1722 = vadd.f32 %v1052, %v1721
    %v1723 = vpop.f32.mrf.mxu0
    %v1724 = vadd.f32 %v1052, %v1723
    %1725 = vmatmul.bf16.gmra.mxu0 %v980
    %v1726 = vpop.f32.mrf.mxu0
    %v1727 = vadd.f32 %v1052, %v1726
    %v1728 = vpop.f32.mrf.mxu0
    %v1729 = vadd.f32 %v1052, %v1728
    %1730 = vmatmul.bf16.gmra.mxu0 %v981
    %v1731 = vpop.f32.mrf.mxu0
    %v1732 = vadd.f32 %v1052, %v1731
    %v1733 = vpop.f32.mrf.mxu0
    %v1734 = vadd.f32 %v1052, %v1733
    %1735 = vmatmul.bf16.gmra.mxu0 %v982
    %v1736 = vpop.f32.mrf.mxu0
    %v1737 = vadd.f32 %v1052, %v1736
    %v1738 = vpop.f32.mrf.mxu0
    %v1739 = vadd.f32 %v1052, %v1738
    %1740 = vdwg.mxu0
    %1741 = vmatpush.bf16.msra.mxu0 %v1317
    %1742 = vmatpush.bf16.msra.mxu0 %v1309
    %1743 = vmatpush.bf16.msra.mxu0 %v1301
    %1744 = vmatpush.bf16.msra.mxu0 %v1293
    %1745 = vmatpush.bf16.msra.mxu0 %v1285
    %1746 = vmatpush.bf16.msra.mxu0 %v1277
    %1747 = vmatpush.bf16.msra.mxu0 %v1269
    %1748 = vmatpush.bf16.msra.mxu0 %v1261
    %1749 = vmatmul.bf16.gmra.mxu0 %v967
    %v1750 = vpop.f32.mrf.mxu0
    %v1751 = vadd.f32 %v1053, %v1750
    %v1752 = vpop.f32.mrf.mxu0
    %v1753 = vadd.f32 %v1053, %v1752
    %1754 = vmatmul.bf16.gmra.mxu0 %v968
    %v1755 = vpop.f32.mrf.mxu0
    %v1756 = vadd.f32 %v1053, %v1755
    %v1757 = vpop.f32.mrf.mxu0
    %v1758 = vadd.f32 %v1053, %v1757
    %1759 = vmatmul.bf16.gmra.mxu0 %v969
    %v1760 = vpop.f32.mrf.mxu0
    %v1761 = vadd.f32 %v1053, %v1760
    %v1762 = vpop.f32.mrf.mxu0
    %v1763 = vadd.f32 %v1053, %v1762
    %1764 = vmatmul.bf16.gmra.mxu0 %v970
    %v1765 = vpop.f32.mrf.mxu0
    %v1766 = vadd.f32 %v1053, %v1765
    %v1767 = vpop.f32.mrf.mxu0
    %v1768 = vadd.f32 %v1053, %v1767
    %1769 = vmatmul.bf16.gmra.mxu0 %v971
    %v1770 = vpop.f32.mrf.mxu0
    %v1771 = vadd.f32 %v1053, %v1770
    %v1772 = vpop.f32.mrf.mxu0
    %v1773 = vadd.f32 %v1053, %v1772
    %1774 = vmatmul.bf16.gmra.mxu0 %v972
    %v1775 = vpop.f32.mrf.mxu0
    %v1776 = vadd.f32 %v1053, %v1775
    %v1777 = vpop.f32.mrf.mxu0
    %v1778 = vadd.f32 %v1053, %v1777
    %1779 = vmatmul.bf16.gmra.mxu0 %v973
    %v1780 = vpop.f32.mrf.mxu0
    %v1781 = vadd.f32 %v1053, %v1780
    %v1782 = vpop.f32.mrf.mxu0
    %v1783 = vadd.f32 %v1053, %v1782
    %1784 = vmatmul.bf16.gmra.mxu0 %v974
    %v1785 = vpop.f32.mrf.mxu0
    %v1786 = vadd.f32 %v1053, %v1785
    %v1787 = vpop.f32.mrf.mxu0
    %v1788 = vadd.f32 %v1053, %v1787
    %1789 = vmatmul.bf16.gmra.mxu0 %v975
    %v1790 = vpop.f32.mrf.mxu0
    %v1791 = vadd.f32 %v1053, %v1790
    %v1792 = vpop.f32.mrf.mxu0
    %v1793 = vadd.f32 %v1053, %v1792
    %1794 = vmatmul.bf16.gmra.mxu0 %v976
    %v1795 = vpop.f32.mrf.mxu0
    %v1796 = vadd.f32 %v1053, %v1795
    %v1797 = vpop.f32.mrf.mxu0
    %v1798 = vadd.f32 %v1053, %v1797
    %1799 = vmatmul.bf16.gmra.mxu0 %v977
    %v1800 = vpop.f32.mrf.mxu0
    %v1801 = vadd.f32 %v1053, %v1800
    %v1802 = vpop.f32.mrf.mxu0
    %v1803 = vadd.f32 %v1053, %v1802
    %1804 = vmatmul.bf16.gmra.mxu0 %v978
    %v1805 = vpop.f32.mrf.mxu0
    %v1806 = vadd.f32 %v1053, %v1805
    %v1807 = vpop.f32.mrf.mxu0
    %v1808 = vadd.f32 %v1053, %v1807
    %1809 = vmatmul.bf16.gmra.mxu0 %v979
    %v1810 = vpop.f32.mrf.mxu0
    %v1811 = vadd.f32 %v1053, %v1810
    %v1812 = vpop.f32.mrf.mxu0
    %v1813 = vadd.f32 %v1053, %v1812
    %1814 = vmatmul.bf16.gmra.mxu0 %v980
    %v1815 = vpop.f32.mrf.mxu0
    %v1816 = vadd.f32 %v1053, %v1815
    %v1817 = vpop.f32.mrf.mxu0
    %v1818 = vadd.f32 %v1053, %v1817
    %1819 = vmatmul.bf16.gmra.mxu0 %v981
    %v1820 = vpop.f32.mrf.mxu0
    %v1821 = vadd.f32 %v1053, %v1820
    %v1822 = vpop.f32.mrf.mxu0
    %v1823 = vadd.f32 %v1053, %v1822
    %1824 = vmatmul.bf16.gmra.mxu0 %v982
    %v1825 = vpop.f32.mrf.mxu0
    %v1826 = vadd.f32 %v1053, %v1825
    %v1827 = vpop.f32.mrf.mxu0
    %v1828 = vadd.f32 %v1053, %v1827
    %1829 = vdwg.mxu0
    %1830 = vmatpush.bf16.msra.mxu0 %v1318
    %1831 = vmatpush.bf16.msra.mxu0 %v1310
    %1832 = vmatpush.bf16.msra.mxu0 %v1302
    %1833 = vmatpush.bf16.msra.mxu0 %v1294
    %1834 = vmatpush.bf16.msra.mxu0 %v1286
    %1835 = vmatpush.bf16.msra.mxu0 %v1278
    %1836 = vmatpush.bf16.msra.mxu0 %v1270
    %1837 = vmatpush.bf16.msra.mxu0 %v1262
    %1838 = vmatmul.bf16.gmra.mxu0 %v967
    %v1839 = vpop.f32.mrf.mxu0
    %v1840 = vadd.f32 %v1054, %v1839
    %v1841 = vpop.f32.mrf.mxu0
    %v1842 = vadd.f32 %v1054, %v1841
    %1843 = vmatmul.bf16.gmra.mxu0 %v968
    %v1844 = vpop.f32.mrf.mxu0
    %v1845 = vadd.f32 %v1054, %v1844
    %v1846 = vpop.f32.mrf.mxu0
    %v1847 = vadd.f32 %v1054, %v1846
    %1848 = vmatmul.bf16.gmra.mxu0 %v969
    %v1849 = vpop.f32.mrf.mxu0
    %v1850 = vadd.f32 %v1054, %v1849
    %v1851 = vpop.f32.mrf.mxu0
    %v1852 = vadd.f32 %v1054, %v1851
    %1853 = vmatmul.bf16.gmra.mxu0 %v970
    %v1854 = vpop.f32.mrf.mxu0
    %v1855 = vadd.f32 %v1054, %v1854
    %v1856 = vpop.f32.mrf.mxu0
    %v1857 = vadd.f32 %v1054, %v1856
    %1858 = vmatmul.bf16.gmra.mxu0 %v971
    %v1859 = vpop.f32.mrf.mxu0
    %v1860 = vadd.f32 %v1054, %v1859
    %v1861 = vpop.f32.mrf.mxu0
    %v1862 = vadd.f32 %v1054, %v1861
    %1863 = vmatmul.bf16.gmra.mxu0 %v972
    %v1864 = vpop.f32.mrf.mxu0
    %v1865 = vadd.f32 %v1054, %v1864
    %v1866 = vpop.f32.mrf.mxu0
    %v1867 = vadd.f32 %v1054, %v1866
    %1868 = vmatmul.bf16.gmra.mxu0 %v973
    %v1869 = vpop.f32.mrf.mxu0
    %v1870 = vadd.f32 %v1054, %v1869
    %v1871 = vpop.f32.mrf.mxu0
    %v1872 = vadd.f32 %v1054, %v1871
    %1873 = vmatmul.bf16.gmra.mxu0 %v974
    %v1874 = vpop.f32.mrf.mxu0
    %v1875 = vadd.f32 %v1054, %v1874
    %v1876 = vpop.f32.mrf.mxu0
    %v1877 = vadd.f32 %v1054, %v1876
    %1878 = vmatmul.bf16.gmra.mxu0 %v975
    %v1879 = vpop.f32.mrf.mxu0
    %v1880 = vadd.f32 %v1054, %v1879
    %v1881 = vpop.f32.mrf.mxu0
    %v1882 = vadd.f32 %v1054, %v1881
    %1883 = vmatmul.bf16.gmra.mxu0 %v976
    %v1884 = vpop.f32.mrf.mxu0
    %v1885 = vadd.f32 %v1054, %v1884
    %v1886 = vpop.f32.mrf.mxu0
    %v1887 = vadd.f32 %v1054, %v1886
    %1888 = vmatmul.bf16.gmra.mxu0 %v977
    %v1889 = vpop.f32.mrf.mxu0
    %v1890 = vadd.f32 %v1054, %v1889
    %v1891 = vpop.f32.mrf.mxu0
    %v1892 = vadd.f32 %v1054, %v1891
    %1893 = vmatmul.bf16.gmra.mxu0 %v978
    %v1894 = vpop.f32.mrf.mxu0
    %v1895 = vadd.f32 %v1054, %v1894
    %v1896 = vpop.f32.mrf.mxu0
    %v1897 = vadd.f32 %v1054, %v1896
    %1898 = vmatmul.bf16.gmra.mxu0 %v979
    %v1899 = vpop.f32.mrf.mxu0
    %v1900 = vadd.f32 %v1054, %v1899
    %v1901 = vpop.f32.mrf.mxu0
    %v1902 = vadd.f32 %v1054, %v1901
    %1903 = vmatmul.bf16.gmra.mxu0 %v980
    %v1904 = vpop.f32.mrf.mxu0
    %v1905 = vadd.f32 %v1054, %v1904
    %v1906 = vpop.f32.mrf.mxu0
    %v1907 = vadd.f32 %v1054, %v1906
    %1908 = vmatmul.bf16.gmra.mxu0 %v981
    %v1909 = vpop.f32.mrf.mxu0
    %v1910 = vadd.f32 %v1054, %v1909
    %v1911 = vpop.f32.mrf.mxu0
    %v1912 = vadd.f32 %v1054, %v1911
    %1913 = vmatmul.bf16.gmra.mxu0 %v982
    %v1914 = vpop.f32.mrf.mxu0
    %v1915 = vadd.f32 %v1054, %v1914
    %v1916 = vpop.f32.mrf.mxu0
    %v1917 = vadd.f32 %v1054, %v1916
    %1918 = vdwg.mxu0
    %1919 = vmatpush.bf16.msra.mxu0 %v1319
    %1920 = vmatpush.bf16.msra.mxu0 %v1311
    %1921 = vmatpush.bf16.msra.mxu0 %v1303
    %1922 = vmatpush.bf16.msra.mxu0 %v1295
    %1923 = vmatpush.bf16.msra.mxu0 %v1287
    %1924 = vmatpush.bf16.msra.mxu0 %v1279
    %1925 = vmatpush.bf16.msra.mxu0 %v1271
    %1926 = vmatpush.bf16.msra.mxu0 %v1263
    %1927 = vmatmul.bf16.gmra.mxu0 %v967
    %v1928 = vpop.f32.mrf.mxu0
    %v1929 = vadd.f32 %v1055, %v1928
    %v1930 = vpop.f32.mrf.mxu0
    %v1931 = vadd.f32 %v1055, %v1930
    %1932 = vmatmul.bf16.gmra.mxu0 %v968
    %v1933 = vpop.f32.mrf.mxu0
    %v1934 = vadd.f32 %v1055, %v1933
    %v1935 = vpop.f32.mrf.mxu0
    %v1936 = vadd.f32 %v1055, %v1935
    %1937 = vmatmul.bf16.gmra.mxu0 %v969
    %v1938 = vpop.f32.mrf.mxu0
    %v1939 = vadd.f32 %v1055, %v1938
    %v1940 = vpop.f32.mrf.mxu0
    %v1941 = vadd.f32 %v1055, %v1940
    %1942 = vmatmul.bf16.gmra.mxu0 %v970
    %v1943 = vpop.f32.mrf.mxu0
    %v1944 = vadd.f32 %v1055, %v1943
    %v1945 = vpop.f32.mrf.mxu0
    %v1946 = vadd.f32 %v1055, %v1945
    %1947 = vmatmul.bf16.gmra.mxu0 %v971
    %v1948 = vpop.f32.mrf.mxu0
    %v1949 = vadd.f32 %v1055, %v1948
    %v1950 = vpop.f32.mrf.mxu0
    %v1951 = vadd.f32 %v1055, %v1950
    %1952 = vmatmul.bf16.gmra.mxu0 %v972
    %v1953 = vpop.f32.mrf.mxu0
    %v1954 = vadd.f32 %v1055, %v1953
    %v1955 = vpop.f32.mrf.mxu0
    %v1956 = vadd.f32 %v1055, %v1955
    %1957 = vmatmul.bf16.gmra.mxu0 %v973
    %v1958 = vpop.f32.mrf.mxu0
    %v1959 = vadd.f32 %v1055, %v1958
    %v1960 = vpop.f32.mrf.mxu0
    %v1961 = vadd.f32 %v1055, %v1960
    %1962 = vmatmul.bf16.gmra.mxu0 %v974
    %v1963 = vpop.f32.mrf.mxu0
    %v1964 = vadd.f32 %v1055, %v1963
    %v1965 = vpop.f32.mrf.mxu0
    %v1966 = vadd.f32 %v1055, %v1965
    %1967 = vmatmul.bf16.gmra.mxu0 %v975
    %v1968 = vpop.f32.mrf.mxu0
    %v1969 = vadd.f32 %v1055, %v1968
    %v1970 = vpop.f32.mrf.mxu0
    %v1971 = vadd.f32 %v1055, %v1970
    %1972 = vmatmul.bf16.gmra.mxu0 %v976
    %v1973 = vpop.f32.mrf.mxu0
    %v1974 = vadd.f32 %v1055, %v1973
    %v1975 = vpop.f32.mrf.mxu0
    %v1976 = vadd.f32 %v1055, %v1975
    %1977 = vmatmul.bf16.gmra.mxu0 %v977
    %v1978 = vpop.f32.mrf.mxu0
    %v1979 = vadd.f32 %v1055, %v1978
    %v1980 = vpop.f32.mrf.mxu0
    %v1981 = vadd.f32 %v1055, %v1980
    %1982 = vmatmul.bf16.gmra.mxu0 %v978
    %v1983 = vpop.f32.mrf.mxu0
    %v1984 = vadd.f32 %v1055, %v1983
    %v1985 = vpop.f32.mrf.mxu0
    %v1986 = vadd.f32 %v1055, %v1985
    %1987 = vmatmul.bf16.gmra.mxu0 %v979
    %v1988 = vpop.f32.mrf.mxu0
    %v1989 = vadd.f32 %v1055, %v1988
    %v1990 = vpop.f32.mrf.mxu0
    %v1991 = vadd.f32 %v1055, %v1990
    %1992 = vmatmul.bf16.gmra.mxu0 %v980
    %v1993 = vpop.f32.mrf.mxu0
    %v1994 = vadd.f32 %v1055, %v1993
    %v1995 = vpop.f32.mrf.mxu0
    %v1996 = vadd.f32 %v1055, %v1995
    %1997 = vmatmul.bf16.gmra.mxu0 %v981
    %v1998 = vpop.f32.mrf.mxu0
    %v1999 = vadd.f32 %v1055, %v1998
    %v2000 = vpop.f32.mrf.mxu0
    %v2001 = vadd.f32 %v1055, %v2000
    %2002 = vmatmul.bf16.gmra.mxu0 %v982
    %v2003 = vpop.f32.mrf.mxu0
    %v2004 = vadd.f32 %v1055, %v2003
    %v2005 = vpop.f32.mrf.mxu0
    %v2006 = vadd.f32 %v1055, %v2005
    %2007 = vdwg.mxu0
    %2008 = vmatpush.bf16.msra.mxu0 %v1320
    %2009 = vmatpush.bf16.msra.mxu0 %v1312
    %2010 = vmatpush.bf16.msra.mxu0 %v1304
    %2011 = vmatpush.bf16.msra.mxu0 %v1296
    %2012 = vmatpush.bf16.msra.mxu0 %v1288
    %2013 = vmatpush.bf16.msra.mxu0 %v1280
    %2014 = vmatpush.bf16.msra.mxu0 %v1272
    %2015 = vmatpush.bf16.msra.mxu0 %v1264
    %2016 = vmatmul.bf16.gmra.mxu0 %v967
    %v2017 = vpop.f32.mrf.mxu0
    %v2018 = vadd.f32 %v1056, %v2017
    %v2019 = vpop.f32.mrf.mxu0
    %v2020 = vadd.f32 %v1056, %v2019
    %2021 = vmatmul.bf16.gmra.mxu0 %v968
    %v2022 = vpop.f32.mrf.mxu0
    %v2023 = vadd.f32 %v1056, %v2022
    %v2024 = vpop.f32.mrf.mxu0
    %v2025 = vadd.f32 %v1056, %v2024
    %2026 = vmatmul.bf16.gmra.mxu0 %v969
    %v2027 = vpop.f32.mrf.mxu0
    %v2028 = vadd.f32 %v1056, %v2027
    %v2029 = vpop.f32.mrf.mxu0
    %v2030 = vadd.f32 %v1056, %v2029
    %2031 = vmatmul.bf16.gmra.mxu0 %v970
    %v2032 = vpop.f32.mrf.mxu0
    %v2033 = vadd.f32 %v1056, %v2032
    %v2034 = vpop.f32.mrf.mxu0
    %v2035 = vadd.f32 %v1056, %v2034
    %2036 = vmatmul.bf16.gmra.mxu0 %v971
    %v2037 = vpop.f32.mrf.mxu0
    %v2038 = vadd.f32 %v1056, %v2037
    %v2039 = vpop.f32.mrf.mxu0
    %v2040 = vadd.f32 %v1056, %v2039
    %2041 = vmatmul.bf16.gmra.mxu0 %v972
    %v2042 = vpop.f32.mrf.mxu0
    %v2043 = vadd.f32 %v1056, %v2042
    %v2044 = vpop.f32.mrf.mxu0
    %v2045 = vadd.f32 %v1056, %v2044
    %2046 = vmatmul.bf16.gmra.mxu0 %v973
    %v2047 = vpop.f32.mrf.mxu0
    %v2048 = vadd.f32 %v1056, %v2047
    %v2049 = vpop.f32.mrf.mxu0
    %v2050 = vadd.f32 %v1056, %v2049
    %2051 = vmatmul.bf16.gmra.mxu0 %v974
    %v2052 = vpop.f32.mrf.mxu0
    %v2053 = vadd.f32 %v1056, %v2052
    %v2054 = vpop.f32.mrf.mxu0
    %v2055 = vadd.f32 %v1056, %v2054
    %2056 = vmatmul.bf16.gmra.mxu0 %v975
    %v2057 = vpop.f32.mrf.mxu0
    %v2058 = vadd.f32 %v1056, %v2057
    %v2059 = vpop.f32.mrf.mxu0
    %v2060 = vadd.f32 %v1056, %v2059
    %2061 = vmatmul.bf16.gmra.mxu0 %v976
    %v2062 = vpop.f32.mrf.mxu0
    %v2063 = vadd.f32 %v1056, %v2062
    %v2064 = vpop.f32.mrf.mxu0
    %v2065 = vadd.f32 %v1056, %v2064
    %2066 = vmatmul.bf16.gmra.mxu0 %v977
    %v2067 = vpop.f32.mrf.mxu0
    %v2068 = vadd.f32 %v1056, %v2067
    %v2069 = vpop.f32.mrf.mxu0
    %v2070 = vadd.f32 %v1056, %v2069
    %2071 = vmatmul.bf16.gmra.mxu0 %v978
    %v2072 = vpop.f32.mrf.mxu0
    %v2073 = vadd.f32 %v1056, %v2072
    %v2074 = vpop.f32.mrf.mxu0
    %v2075 = vadd.f32 %v1056, %v2074
    %2076 = vmatmul.bf16.gmra.mxu0 %v979
    %v2077 = vpop.f32.mrf.mxu0
    %v2078 = vadd.f32 %v1056, %v2077
    %v2079 = vpop.f32.mrf.mxu0
    %v2080 = vadd.f32 %v1056, %v2079
    %2081 = vmatmul.bf16.gmra.mxu0 %v980
    %v2082 = vpop.f32.mrf.mxu0
    %v2083 = vadd.f32 %v1056, %v2082
    %v2084 = vpop.f32.mrf.mxu0
    %v2085 = vadd.f32 %v1056, %v2084
    %2086 = vmatmul.bf16.gmra.mxu0 %v981
    %v2087 = vpop.f32.mrf.mxu0
    %v2088 = vadd.f32 %v1056, %v2087
    %v2089 = vpop.f32.mrf.mxu0
    %v2090 = vadd.f32 %v1056, %v2089
    %2091 = vmatmul.bf16.gmra.mxu0 %v982
    %v2092 = vpop.f32.mrf.mxu0
    %v2093 = vadd.f32 %v1056, %v2092
    %v2094 = vpop.f32.mrf.mxu0
    %v2095 = vadd.f32 %v1056, %v2094
    %2096 = vdwg.mxu0
    %2097 = vst [vmem:[#allocation14] sm:$0xff] %v1395
    %2098 = vst [vmem:[#allocation14 + $0x8] sm:$0xff] %v1484
    %2099 = vst [vmem:[#allocation14 + $0x10] sm:$0xff] %v1573
    %2100 = vst [vmem:[#allocation14 + $0x18] sm:$0xff] %v1662
    %2101 = vst [vmem:[#allocation14 + $0x20] sm:$0xff] %v1751
    %2102 = vst [vmem:[#allocation14 + $0x28] sm:$0xff] %v1840
    %2103 = vst [vmem:[#allocation14 + $0x30] sm:$0xff] %v1929
    %2104 = vst [vmem:[#allocation14 + $0x38] sm:$0xff] %v2018
    %2105 = vst [vmem:[#allocation14 + $0x40] sm:$0xff] %v1397
    %2106 = vst [vmem:[#allocation14 + $0x48] sm:$0xff] %v1486
    %2107 = vst [vmem:[#allocation14 + $0x50] sm:$0xff] %v1575
    %2108 = vst [vmem:[#allocation14 + $0x58] sm:$0xff] %v1664
    %2109 = vst [vmem:[#allocation14 + $0x60] sm:$0xff] %v1753
    %2110 = vst [vmem:[#allocation14 + $0x68] sm:$0xff] %v1842
    %2111 = vst [vmem:[#allocation14 + $0x70] sm:$0xff] %v1931
    %2112 = vst [vmem:[#allocation14 + $0x78] sm:$0xff] %v2020
    %2113 = vst [vmem:[#allocation14 + $0x80] sm:$0xff] %v1400
    %2114 = vst [vmem:[#allocation14 + $0x88] sm:$0xff] %v1489
    %2115 = vst [vmem:[#allocation14 + $0x90] sm:$0xff] %v1578
    %2116 = vst [vmem:[#allocation14 + $0x98] sm:$0xff] %v1667
    %2117 = vst [vmem:[#allocation14 + $0xa0] sm:$0xff] %v1756
    %2118 = vst [vmem:[#allocation14 + $0xa8] sm:$0xff] %v1845
    %2119 = vst [vmem:[#allocation14 + $0xb0] sm:$0xff] %v1934
    %2120 = vst [vmem:[#allocation14 + $0xb8] sm:$0xff] %v2023
    %2121 = vst [vmem:[#allocation14 + $0xc0] sm:$0xff] %v1402
    %2122 = vst [vmem:[#allocation14 + $0xc8] sm:$0xff] %v1491
    %2123 = vst [vmem:[#allocation14 + $0xd0] sm:$0xff] %v1580
    %2124 = vst [vmem:[#allocation14 + $0xd8] sm:$0xff] %v1669
    %2125 = vst [vmem:[#allocation14 + $0xe0] sm:$0xff] %v1758
    %2126 = vst [vmem:[#allocation14 + $0xe8] sm:$0xff] %v1847
    %2127 = vst [vmem:[#allocation14 + $0xf0] sm:$0xff] %v1936
    %2128 = vst [vmem:[#allocation14 + $0xf8] sm:$0xff] %v2025
    %2129 = vst [vmem:[#allocation14 + $0x100] sm:$0xff] %v1405
    %2130 = vst [vmem:[#allocation14 + $0x108] sm:$0xff] %v1494
    %2131 = vst [vmem:[#allocation14 + $0x110] sm:$0xff] %v1583
    %2132 = vst [vmem:[#allocation14 + $0x118] sm:$0xff] %v1672
    %2133 = vst [vmem:[#allocation14 + $0x120] sm:$0xff] %v1761
    %2134 = vst [vmem:[#allocation14 + $0x128] sm:$0xff] %v1850
    %2135 = vst [vmem:[#allocation14 + $0x130] sm:$0xff] %v1939
    %2136 = vst [vmem:[#allocation14 + $0x138] sm:$0xff] %v2028
    %2137 = vst [vmem:[#allocation14 + $0x140] sm:$0xff] %v1407
    %2138 = vst [vmem:[#allocation14 + $0x148] sm:$0xff] %v1496
    %2139 = vst [vmem:[#allocation14 + $0x150] sm:$0xff] %v1585
    %2140 = vst [vmem:[#allocation14 + $0x158] sm:$0xff] %v1674
    %2141 = vst [vmem:[#allocation14 + $0x160] sm:$0xff] %v1763
    %2142 = vst [vmem:[#allocation14 + $0x168] sm:$0xff] %v1852
    %2143 = vst [vmem:[#allocation14 + $0x170] sm:$0xff] %v1941
    %2144 = vst [vmem:[#allocation14 + $0x178] sm:$0xff] %v2030
    %2145 = vst [vmem:[#allocation14 + $0x180] sm:$0xff] %v1410
    %2146 = vst [vmem:[#allocation14 + $0x188] sm:$0xff] %v1499
    %2147 = vst [vmem:[#allocation14 + $0x190] sm:$0xff] %v1588
    %2148 = vst [vmem:[#allocation14 + $0x198] sm:$0xff] %v1677
    %2149 = vst [vmem:[#allocation14 + $0x1a0] sm:$0xff] %v1766
    %2150 = vst [vmem:[#allocation14 + $0x1a8] sm:$0xff] %v1855
    %2151 = vst [vmem:[#allocation14 + $0x1b0] sm:$0xff] %v1944
    %2152 = vst [vmem:[#allocation14 + $0x1b8] sm:$0xff] %v2033
    %2153 = vst [vmem:[#allocation14 + $0x1c0] sm:$0xff] %v1412
    %2154 = vst [vmem:[#allocation14 + $0x1c8] sm:$0xff] %v1501
    %2155 = vst [vmem:[#allocation14 + $0x1d0] sm:$0xff] %v1590
    %2156 = vst [vmem:[#allocation14 + $0x1d8] sm:$0xff] %v1679
    %2157 = vst [vmem:[#allocation14 + $0x1e0] sm:$0xff] %v1768
    %2158 = vst [vmem:[#allocation14 + $0x1e8] sm:$0xff] %v1857
    %2159 = vst [vmem:[#allocation14 + $0x1f0] sm:$0xff] %v1946
    %2160 = vst [vmem:[#allocation14 + $0x1f8] sm:$0xff] %v2035
    %2161 = vst [vmem:[#allocation14 + $0x200] sm:$0xff] %v1415
    %2162 = vst [vmem:[#allocation14 + $0x208] sm:$0xff] %v1504
    %2163 = vst [vmem:[#allocation14 + $0x210] sm:$0xff] %v1593
    %2164 = vst [vmem:[#allocation14 + $0x218] sm:$0xff] %v1682
    %2165 = vst [vmem:[#allocation14 + $0x220] sm:$0xff] %v1771
    %2166 = vst [vmem:[#allocation14 + $0x228] sm:$0xff] %v1860
    %2167 = vst [vmem:[#allocation14 + $0x230] sm:$0xff] %v1949
    %2168 = vst [vmem:[#allocation14 + $0x238] sm:$0xff] %v2038
    %2169 = vst [vmem:[#allocation14 + $0x240] sm:$0xff] %v1417
    %2170 = vst [vmem:[#allocation14 + $0x248] sm:$0xff] %v1506
    %2171 = vst [vmem:[#allocation14 + $0x250] sm:$0xff] %v1595
    %2172 = vst [vmem:[#allocation14 + $0x258] sm:$0xff] %v1684
    %2173 = vst [vmem:[#allocation14 + $0x260] sm:$0xff] %v1773
    %2174 = vst [vmem:[#allocation14 + $0x268] sm:$0xff] %v1862
    %2175 = vst [vmem:[#allocation14 + $0x270] sm:$0xff] %v1951
    %2176 = vst [vmem:[#allocation14 + $0x278] sm:$0xff] %v2040
    %2177 = vst [vmem:[#allocation14 + $0x280] sm:$0xff] %v1420
    %2178 = vst [vmem:[#allocation14 + $0x288] sm:$0xff] %v1509
    %2179 = vst [vmem:[#allocation14 + $0x290] sm:$0xff] %v1598
    %2180 = vst [vmem:[#allocation14 + $0x298] sm:$0xff] %v1687
    %2181 = vst [vmem:[#allocation14 + $0x2a0] sm:$0xff] %v1776
    %2182 = vst [vmem:[#allocation14 + $0x2a8] sm:$0xff] %v1865
    %2183 = vst [vmem:[#allocation14 + $0x2b0] sm:$0xff] %v1954
    %2184 = vst [vmem:[#allocation14 + $0x2b8] sm:$0xff] %v2043
    %2185 = vst [vmem:[#allocation14 + $0x2c0] sm:$0xff] %v1422
    %2186 = vst [vmem:[#allocation14 + $0x2c8] sm:$0xff] %v1511
    %2187 = vst [vmem:[#allocation14 + $0x2d0] sm:$0xff] %v1600
    %2188 = vst [vmem:[#allocation14 + $0x2d8] sm:$0xff] %v1689
    %2189 = vst [vmem:[#allocation14 + $0x2e0] sm:$0xff] %v1778
    %2190 = vst [vmem:[#allocation14 + $0x2e8] sm:$0xff] %v1867
    %2191 = vst [vmem:[#allocation14 + $0x2f0] sm:$0xff] %v1956
    %2192 = vst [vmem:[#allocation14 + $0x2f8] sm:$0xff] %v2045
    %2193 = vst [vmem:[#allocation14 + $0x300] sm:$0xff] %v1425
    %2194 = vst [vmem:[#allocation14 + $0x308] sm:$0xff] %v1514
    %2195 = vst [vmem:[#allocation14 + $0x310] sm:$0xff] %v1603
    %2196 = vst [vmem:[#allocation14 + $0x318] sm:$0xff] %v1692
    %2197 = vst [vmem:[#allocation14 + $0x320] sm:$0xff] %v1781
    %2198 = vst [vmem:[#allocation14 + $0x328] sm:$0xff] %v1870
    %2199 = vst [vmem:[#allocation14 + $0x330] sm:$0xff] %v1959
    %2200 = vst [vmem:[#allocation14 + $0x338] sm:$0xff] %v2048
    %2201 = vst [vmem:[#allocation14 + $0x340] sm:$0xff] %v1427
    %2202 = vst [vmem:[#allocation14 + $0x348] sm:$0xff] %v1516
    %2203 = vst [vmem:[#allocation14 + $0x350] sm:$0xff] %v1605
    %2204 = vst [vmem:[#allocation14 + $0x358] sm:$0xff] %v1694
    %2205 = vst [vmem:[#allocation14 + $0x360] sm:$0xff] %v1783
    %2206 = vst [vmem:[#allocation14 + $0x368] sm:$0xff] %v1872
    %2207 = vst [vmem:[#allocation14 + $0x370] sm:$0xff] %v1961
    %2208 = vst [vmem:[#allocation14 + $0x378] sm:$0xff] %v2050
    %2209 = vst [vmem:[#allocation14 + $0x380] sm:$0xff] %v1430
    %2210 = vst [vmem:[#allocation14 + $0x388] sm:$0xff] %v1519
    %2211 = vst [vmem:[#allocation14 + $0x390] sm:$0xff] %v1608
    %2212 = vst [vmem:[#allocation14 + $0x398] sm:$0xff] %v1697
    %2213 = vst [vmem:[#allocation14 + $0x3a0] sm:$0xff] %v1786
    %2214 = vst [vmem:[#allocation14 + $0x3a8] sm:$0xff] %v1875
    %2215 = vst [vmem:[#allocation14 + $0x3b0] sm:$0xff] %v1964
    %2216 = vst [vmem:[#allocation14 + $0x3b8] sm:$0xff] %v2053
    %2217 = vst [vmem:[#allocation14 + $0x3c0] sm:$0xff] %v1432
    %2218 = vst [vmem:[#allocation14 + $0x3c8] sm:$0xff] %v1521
    %2219 = vst [vmem:[#allocation14 + $0x3d0] sm:$0xff] %v1610
    %2220 = vst [vmem:[#allocation14 + $0x3d8] sm:$0xff] %v1699
    %2221 = vst [vmem:[#allocation14 + $0x3e0] sm:$0xff] %v1788
    %2222 = vst [vmem:[#allocation14 + $0x3e8] sm:$0xff] %v1877
    %2223 = vst [vmem:[#allocation14 + $0x3f0] sm:$0xff] %v1966
    %2224 = vst [vmem:[#allocation14 + $0x3f8] sm:$0xff] %v2055
    %2225 = vst [vmem:[#allocation14 + $0x400] sm:$0xff] %v1435
    %2226 = vst [vmem:[#allocation14 + $0x408] sm:$0xff] %v1524
    %2227 = vst [vmem:[#allocation14 + $0x410] sm:$0xff] %v1613
    %2228 = vst [vmem:[#allocation14 + $0x418] sm:$0xff] %v1702
    %2229 = vst [vmem:[#allocation14 + $0x420] sm:$0xff] %v1791
    %2230 = vst [vmem:[#allocation14 + $0x428] sm:$0xff] %v1880
    %2231 = vst [vmem:[#allocation14 + $0x430] sm:$0xff] %v1969
    %2232 = vst [vmem:[#allocation14 + $0x438] sm:$0xff] %v2058
    %2233 = vst [vmem:[#allocation14 + $0x440] sm:$0xff] %v1437
    %2234 = vst [vmem:[#allocation14 + $0x448] sm:$0xff] %v1526
    %2235 = vst [vmem:[#allocation14 + $0x450] sm:$0xff] %v1615
    %2236 = vst [vmem:[#allocation14 + $0x458] sm:$0xff] %v1704
    %2237 = vst [vmem:[#allocation14 + $0x460] sm:$0xff] %v1793
    %2238 = vst [vmem:[#allocation14 + $0x468] sm:$0xff] %v1882
    %2239 = vst [vmem:[#allocation14 + $0x470] sm:$0xff] %v1971
    %2240 = vst [vmem:[#allocation14 + $0x478] sm:$0xff] %v2060
    %2241 = vst [vmem:[#allocation14 + $0x480] sm:$0xff] %v1440
    %2242 = vst [vmem:[#allocation14 + $0x488] sm:$0xff] %v1529
    %2243 = vst [vmem:[#allocation14 + $0x490] sm:$0xff] %v1618
    %2244 = vst [vmem:[#allocation14 + $0x498] sm:$0xff] %v1707
    %2245 = vst [vmem:[#allocation14 + $0x4a0] sm:$0xff] %v1796
    %2246 = vst [vmem:[#allocation14 + $0x4a8] sm:$0xff] %v1885
    %2247 = vst [vmem:[#allocation14 + $0x4b0] sm:$0xff] %v1974
    %2248 = vst [vmem:[#allocation14 + $0x4b8] sm:$0xff] %v2063
    %2249 = vst [vmem:[#allocation14 + $0x4c0] sm:$0xff] %v1442
    %2250 = vst [vmem:[#allocation14 + $0x4c8] sm:$0xff] %v1531
    %2251 = vst [vmem:[#allocation14 + $0x4d0] sm:$0xff] %v1620
    %2252 = vst [vmem:[#allocation14 + $0x4d8] sm:$0xff] %v1709
    %2253 = vst [vmem:[#allocation14 + $0x4e0] sm:$0xff] %v1798
    %2254 = vst [vmem:[#allocation14 + $0x4e8] sm:$0xff] %v1887
    %2255 = vst [vmem:[#allocation14 + $0x4f0] sm:$0xff] %v1976
    %2256 = vst [vmem:[#allocation14 + $0x4f8] sm:$0xff] %v2065
    %2257 = vst [vmem:[#allocation14 + $0x500] sm:$0xff] %v1445
    %2258 = vst [vmem:[#allocation14 + $0x508] sm:$0xff] %v1534
    %2259 = vst [vmem:[#allocation14 + $0x510] sm:$0xff] %v1623
    %2260 = vst [vmem:[#allocation14 + $0x518] sm:$0xff] %v1712
    %2261 = vst [vmem:[#allocation14 + $0x520] sm:$0xff] %v1801
    %2262 = vst [vmem:[#allocation14 + $0x528] sm:$0xff] %v1890
    %2263 = vst [vmem:[#allocation14 + $0x530] sm:$0xff] %v1979
    %2264 = vst [vmem:[#allocation14 + $0x538] sm:$0xff] %v2068
    %2265 = vst [vmem:[#allocation14 + $0x540] sm:$0xff] %v1447
    %2266 = vst [vmem:[#allocation14 + $0x548] sm:$0xff] %v1536
    %2267 = vst [vmem:[#allocation14 + $0x550] sm:$0xff] %v1625
    %2268 = vst [vmem:[#allocation14 + $0x558] sm:$0xff] %v1714
    %2269 = vst [vmem:[#allocation14 + $0x560] sm:$0xff] %v1803
    %2270 = vst [vmem:[#allocation14 + $0x568] sm:$0xff] %v1892
    %2271 = vst [vmem:[#allocation14 + $0x570] sm:$0xff] %v1981
    %2272 = vst [vmem:[#allocation14 + $0x578] sm:$0xff] %v2070
    %2273 = vst [vmem:[#allocation14 + $0x580] sm:$0xff] %v1450
    %2274 = vst [vmem:[#allocation14 + $0x588] sm:$0xff] %v1539
    %2275 = vst [vmem:[#allocation14 + $0x590] sm:$0xff] %v1628
    %2276 = vst [vmem:[#allocation14 + $0x598] sm:$0xff] %v1717
    %2277 = vst [vmem:[#allocation14 + $0x5a0] sm:$0xff] %v1806
    %2278 = vst [vmem:[#allocation14 + $0x5a8] sm:$0xff] %v1895
    %2279 = vst [vmem:[#allocation14 + $0x5b0] sm:$0xff] %v1984
    %2280 = vst [vmem:[#allocation14 + $0x5b8] sm:$0xff] %v2073
    %2281 = vst [vmem:[#allocation14 + $0x5c0] sm:$0xff] %v1452
    %2282 = vst [vmem:[#allocation14 + $0x5c8] sm:$0xff] %v1541
    %2283 = vst [vmem:[#allocation14 + $0x5d0] sm:$0xff] %v1630
    %2284 = vst [vmem:[#allocation14 + $0x5d8] sm:$0xff] %v1719
    %2285 = vst [vmem:[#allocation14 + $0x5e0] sm:$0xff] %v1808
    %2286 = vst [vmem:[#allocation14 + $0x5e8] sm:$0xff] %v1897
    %2287 = vst [vmem:[#allocation14 + $0x5f0] sm:$0xff] %v1986
    %2288 = vst [vmem:[#allocation14 + $0x5f8] sm:$0xff] %v2075
    %2289 = vst [vmem:[#allocation14 + $0x600] sm:$0xff] %v1455
    %2290 = vst [vmem:[#allocation14 + $0x608] sm:$0xff] %v1544
    %2291 = vst [vmem:[#allocation14 + $0x610] sm:$0xff] %v1633
    %2292 = vst [vmem:[#allocation14 + $0x618] sm:$0xff] %v1722
    %2293 = vst [vmem:[#allocation14 + $0x620] sm:$0xff] %v1811
    %2294 = vst [vmem:[#allocation14 + $0x628] sm:$0xff] %v1900
    %2295 = vst [vmem:[#allocation14 + $0x630] sm:$0xff] %v1989
    %2296 = vst [vmem:[#allocation14 + $0x638] sm:$0xff] %v2078
    %2297 = vst [vmem:[#allocation14 + $0x640] sm:$0xff] %v1457
    %2298 = vst [vmem:[#allocation14 + $0x648] sm:$0xff] %v1546
    %2299 = vst [vmem:[#allocation14 + $0x650] sm:$0xff] %v1635
    %2300 = vst [vmem:[#allocation14 + $0x658] sm:$0xff] %v1724
    %2301 = vst [vmem:[#allocation14 + $0x660] sm:$0xff] %v1813
    %2302 = vst [vmem:[#allocation14 + $0x668] sm:$0xff] %v1902
    %2303 = vst [vmem:[#allocation14 + $0x670] sm:$0xff] %v1991
    %2304 = vst [vmem:[#allocation14 + $0x678] sm:$0xff] %v2080
    %2305 = vst [vmem:[#allocation14 + $0x680] sm:$0xff] %v1460
    %2306 = vst [vmem:[#allocation14 + $0x688] sm:$0xff] %v1549
    %2307 = vst [vmem:[#allocation14 + $0x690] sm:$0xff] %v1638
    %2308 = vst [vmem:[#allocation14 + $0x698] sm:$0xff] %v1727
    %2309 = vst [vmem:[#allocation14 + $0x6a0] sm:$0xff] %v1816
    %2310 = vst [vmem:[#allocation14 + $0x6a8] sm:$0xff] %v1905
    %2311 = vst [vmem:[#allocation14 + $0x6b0] sm:$0xff] %v1994
    %2312 = vst [vmem:[#allocation14 + $0x6b8] sm:$0xff] %v2083
    %2313 = vst [vmem:[#allocation14 + $0x6c0] sm:$0xff] %v1462
    %2314 = vst [vmem:[#allocation14 + $0x6c8] sm:$0xff] %v1551
    %2315 = vst [vmem:[#allocation14 + $0x6d0] sm:$0xff] %v1640
    %2316 = vst [vmem:[#allocation14 + $0x6d8] sm:$0xff] %v1729
    %2317 = vst [vmem:[#allocation14 + $0x6e0] sm:$0xff] %v1818
    %2318 = vst [vmem:[#allocation14 + $0x6e8] sm:$0xff] %v1907
    %2319 = vst [vmem:[#allocation14 + $0x6f0] sm:$0xff] %v1996
    %2320 = vst [vmem:[#allocation14 + $0x6f8] sm:$0xff] %v2085
    %2321 = vst [vmem:[#allocation14 + $0x700] sm:$0xff] %v1465
    %2322 = vst [vmem:[#allocation14 + $0x708] sm:$0xff] %v1554
    %2323 = vst [vmem:[#allocation14 + $0x710] sm:$0xff] %v1643
    %2324 = vst [vmem:[#allocation14 + $0x718] sm:$0xff] %v1732
    %2325 = vst [vmem:[#allocation14 + $0x720] sm:$0xff] %v1821
    %2326 = vst [vmem:[#allocation14 + $0x728] sm:$0xff] %v1910
    %2327 = vst [vmem:[#allocation14 + $0x730] sm:$0xff] %v1999
    %2328 = vst [vmem:[#allocation14 + $0x738] sm:$0xff] %v2088
    %2329 = vst [vmem:[#allocation14 + $0x740] sm:$0xff] %v1467
    %2330 = vst [vmem:[#allocation14 + $0x748] sm:$0xff] %v1556
    %2331 = vst [vmem:[#allocation14 + $0x750] sm:$0xff] %v1645
    %2332 = vst [vmem:[#allocation14 + $0x758] sm:$0xff] %v1734
    %2333 = vst [vmem:[#allocation14 + $0x760] sm:$0xff] %v1823
    %2334 = vst [vmem:[#allocation14 + $0x768] sm:$0xff] %v1912
    %2335 = vst [vmem:[#allocation14 + $0x770] sm:$0xff] %v2001
    %2336 = vst [vmem:[#allocation14 + $0x778] sm:$0xff] %v2090
    %2337 = vst [vmem:[#allocation14 + $0x780] sm:$0xff] %v1470
    %2338 = vst [vmem:[#allocation14 + $0x788] sm:$0xff] %v1559
    %2339 = vst [vmem:[#allocation14 + $0x790] sm:$0xff] %v1648
    %2340 = vst [vmem:[#allocation14 + $0x798] sm:$0xff] %v1737
    %2341 = vst [vmem:[#allocation14 + $0x7a0] sm:$0xff] %v1826
    %2342 = vst [vmem:[#allocation14 + $0x7a8] sm:$0xff] %v1915
    %2343 = vst [vmem:[#allocation14 + $0x7b0] sm:$0xff] %v2004
    %2344 = vst [vmem:[#allocation14 + $0x7b8] sm:$0xff] %v2093
    %2345 = vst [vmem:[#allocation14 + $0x7c0] sm:$0xff] %v1472
    %2346 = vst [vmem:[#allocation14 + $0x7c8] sm:$0xff] %v1561
    %2347 = vst [vmem:[#allocation14 + $0x7d0] sm:$0xff] %v1650
    %2348 = vst [vmem:[#allocation14 + $0x7d8] sm:$0xff] %v1739
    %2349 = vst [vmem:[#allocation14 + $0x7e0] sm:$0xff] %v1828
    %2350 = vst [vmem:[#allocation14 + $0x7e8] sm:$0xff] %v1917
    %2351 = vst [vmem:[#allocation14 + $0x7f0] sm:$0xff] %v2006
    %2352 = vst [vmem:[#allocation14 + $0x7f8] sm:$0xff] %v2095
    // Predicated region
    $region58: #{tpu_custom_call.1} parent=1 // pred_check
      _
    $region59: #{tpu_custom_call.1} parent=1 // pred_check_branch
      %2354 = sbr.rel (0) target = $region61
    $region60: #{tpu_custom_call.1} parent=1 // pred_region
      %2356 = vsyncadd [#allocation4], 0
      %s2357 = sshll.u32 [#allocation13], 4
      %s2358 = int_to_ptr.vmem [resolvable:$true] %s2357
      %s2359 = sshll.u32 %s8, 4
      %s2360 = int_to_ptr.hbm [resolvable:$true] %s2359
      %2365 = dma.vmem_to_hbm [thread:$0]  %s2358, 2048, %s2360, [#allocation4], 64, 64, 4
    $region61: #{tpu_custom_call.1} parent=1 // pred_fallthru
      _
    // Predicated region
    $region62: #{tpu_custom_call.1} parent=1 // pred_check
      _
    $region63: #{tpu_custom_call.1} parent=1 // pred_check_branch
      %2367 = sbr.rel (0) target = $region65
    $region64: #{tpu_custom_call.1} parent=1 // pred_region
      %2369 = vsyncadd [#allocation15], 0
      %s2370 = sshll.u32 [#allocation14], 4
      %s2371 = int_to_ptr.vmem [resolvable:$true] %s2370
      %s2372 = sshll.u32 %s9, 4
      %s2373 = int_to_ptr.hbm [resolvable:$true] %s2372
      %2378 = dma.vmem_to_hbm [thread:$0]  %s2371, 32768, %s2373, [#allocation15], 1024, 1024, 64
    $region65: #{tpu_custom_call.1} parent=1 // pred_fallthru
      _
    // Predicated region
    $region66: #{tpu_custom_call.1} parent=1 // pred_check
      _
    $region67: #{tpu_custom_call.1} parent=1 // pred_check_branch
      %2380 = sbr.rel (0) target = $region69
    $region68: #{tpu_custom_call.1} parent=1 // pred_region
      %2382 = dma.done [#allocation4], 2048
    $region69: #{tpu_custom_call.1} parent=1 // pred_fallthru
      _
    // Predicated region
    $region70: #{tpu_custom_call.1} parent=1 // pred_check
      _
    $region71: #{tpu_custom_call.1} parent=1 // pred_check_branch
      %2384 = sbr.rel (0) target = $region73
    $region72: #{tpu_custom_call.1} parent=1 // pred_region
      %2386 = dma.done [#allocation15], 32768
    $region73: #{tpu_custom_call.1} parent=1 // pred_fallthru
      _
    %2387 = vsyncpa [#allocation3], 1
    %2388 = vsyncpa [#allocation6], 1
    %2389 = vsyncpa [#allocation9], 1
    %2390 = vsyncpa [#allocation12], 1
    %2391 = vsyncpa [#allocation4], 1
    %2392 = vsyncpa [#allocation15], 1

</llo_original>
